<compile_context>
chip_gen: v7x
topology: tpu7x:2x2x1
jax: 0.10.0
libtpu: 0.0.40
codegen_flags: <defaults>
</compile_context>

<pallas_src>
import functools

import jax
import jax.numpy as jnp
from jax.experimental import pallas as pl
from jax.experimental.pallas import tpu as pltpu

HIDDEN1 = 800
HIDDEN2 = 600


def _round_up(n, m):
    return ((n + m - 1) // m) * m


def qnetwork_kernel(x_ref, w1_ref, b1_ref, w2_ref, b2_ref, w3_ref, b3_ref, out_ref):
    # fc1 -> relu  (bf16 inputs, f32 accumulation)
    x = x_ref[...].astype(jnp.bfloat16)
    h1 = jnp.dot(x, w1_ref[...], preferred_element_type=jnp.float32)
    h1 = jnp.maximum(h1 + b1_ref[...], 0.0)
    # fc2 -> relu
    h2 = jnp.dot(h1.astype(jnp.bfloat16), w2_ref[...],
                 preferred_element_type=jnp.float32)
    h2 = jnp.maximum(h2 + b2_ref[...], 0.0)
    # fc3 (no activation)
    h3 = jnp.dot(h2.astype(jnp.bfloat16), w3_ref[...],
                 preferred_element_type=jnp.float32)
    out_ref[...] = (h3 + b3_ref[...]).astype(out_ref.dtype)


@functools.partial(jax.jit, static_argnames=("action_size",))
def qnetwork_forward(x, params, action_size):
    """x: (B, state_size) float32.
    params: w* stored (in, out) bf16, b* stored (1, out) f32; last layer padded
    to a 128-multiple of lanes (padded columns have zero weight/bias)."""
    w1, b1, w2, b2, w3, b3 = (params["w1"], params["b1"], params["w2"],
                              params["b2"], params["w3"], params["b3"])
    B, S = x.shape
    A_pad = w3.shape[1]

    # Batch tiling: sublane-align tiny batches, 128-row tiles for big ones.
    TM = 128 if B > 128 else _round_up(B, 8)
    B_pad = _round_up(B, TM)
    if B_pad != B:
        x = jnp.pad(x, ((0, B_pad - B), (0, 0)))
    grid = (B_pad // TM,)

    flops = 2 * B_pad * (S * HIDDEN1 + HIDDEN1 * HIDDEN2 + HIDDEN2 * A_pad)
    bytes_accessed = int(
        x.size * 4                                   # activations in
        + (w1.size + w2.size + w3.size) * 2          # bf16 weights
        + (b1.size + b2.size + b3.size) * 4          # f32 biases
        + B_pad * A_pad * 4                          # output
    )

    resident = lambda i: (0, 0)  # weights/biases: same block every grid step

    out = pl.pallas_call(
        qnetwork_kernel,
        out_shape=jax.ShapeDtypeStruct((B_pad, A_pad), jnp.float32),
        grid=grid,
        in_specs=[
            pl.BlockSpec((TM, S), lambda i: (i, 0)),      # x tile streams
            pl.BlockSpec(w1.shape, resident),
            pl.BlockSpec(b1.shape, resident),
            pl.BlockSpec(w2.shape, resident),
            pl.BlockSpec(b2.shape, resident),
            pl.BlockSpec(w3.shape, resident),
            pl.BlockSpec(b3.shape, resident),
        ],
        out_specs=pl.BlockSpec((TM, A_pad), lambda i: (i, 0)),
        compiler_params=pltpu.CompilerParams(
            dimension_semantics=("parallel",)),
        cost_estimate=pl.CostEstimate(
            flops=flops, transcendentals=0, bytes_accessed=bytes_accessed),
    )(x, w1, b1, w2, b2, w3, b3)

    # Strip batch padding and padded action lanes.
    return out[:B, :action_size]


def init_params(key, state_size, action_size):
    """PyTorch nn.Linear-style init (uniform +/- 1/sqrt(fan_in)).
    Weights stored transposed (in, out) in bf16; biases (1, out) in f32.
    Final layer zero-padded to a 128-multiple of output lanes."""
    ks = jax.random.split(key, 6)

    def linear(kw, kb, fan_in, fan_out, pad_to=None):
        bound = 1.0 / jnp.sqrt(jnp.float32(fan_in))
        w = jax.random.uniform(kw, (fan_in, fan_out), jnp.float32, -bound, bound)
        b = jax.random.uniform(kb, (1, fan_out), jnp.float32, -bound, bound)
        if pad_to is not None and pad_to > fan_out:
            w = jnp.pad(w, ((0, 0), (0, pad_to - fan_out)))   # zero weights
            b = jnp.pad(b, ((0, 0), (0, pad_to - fan_out)))   # zero biases
        return w.astype(jnp.bfloat16), b

    a_pad = _round_up(action_size, 128)
    w1, b1 = linear(ks[0], ks[1], state_size, HIDDEN1)
    w2, b2 = linear(ks[2], ks[3], HIDDEN1, HIDDEN2)
    w3, b3 = linear(ks[4], ks[5], HIDDEN2, action_size, pad_to=a_pad)
    return {"w1": w1, "b1": b1, "w2": w2, "b2": b2, "w3": w3, "b3": b3}


def reference_forward(x, params, action_size):
    """Plain-JAX reference mirroring the kernel's bf16-input / f32-accumulate math."""
    def mm(a, w):
        return jnp.dot(a.astype(jnp.bfloat16), w, preferred_element_type=jnp.float32)

    h1 = jnp.maximum(mm(x, params["w1"]) + params["b1"], 0.0)
    h2 = jnp.maximum(mm(h1, params["w2"]) + params["b2"], 0.0)
    out = mm(h2, params["w3"]) + params["b3"]
    return out[:, :action_size]


if __name__ == "__main__":
    key = jax.random.PRNGKey(0)
    k_params, k_x = jax.random.split(key)

    batch = 2
    state_size = 16
    action_size = 4

    params = init_params(k_params, state_size, action_size)
    x = jax.random.normal(k_x, (batch, state_size), jnp.float32)

    out = qnetwork_forward(x, params, action_size)
    out = jax.block_until_ready(out)

    ref = reference_forward(x, params, action_size)
    assert out.shape == (batch, action_size)
    assert jnp.allclose(out, ref, atol=1e-2, rtol=1e-2), "mismatch vs reference"

    print("KERNEL_OK")
</pallas_src>

<mosaic_0001>
module attributes {stable_mosaic.version = 11 : i64} {
  func.func @qnetwork_kernel(%arg0: i32, %arg1: memref<8x16xf32, #tpu.memory_space<vmem>>, %arg2: memref<16x800xbf16, #tpu.memory_space<vmem>>, %arg3: memref<1x800xf32, #tpu.memory_space<vmem>>, %arg4: memref<800x600xbf16, #tpu.memory_space<vmem>>, %arg5: memref<1x600xf32, #tpu.memory_space<vmem>>, %arg6: memref<600x128xbf16, #tpu.memory_space<vmem>>, %arg7: memref<1x128xf32, #tpu.memory_space<vmem>>, %arg8: memref<8x128xf32, #tpu.memory_space<vmem>>) attributes {dimension_semantics = [#tpu.dimension_semantics<parallel>], iteration_bounds = array<i64: 1>, scalar_prefetch = 0 : i64, scratch_operands = 0 : i64, tpu.core_type = #tpu.core_type<tc>, window_params = [{transform_indices = @transform_0, window_bounds = array<i64: 8, 16>}, {pipeline_mode = #tpu.pipeline_mode<synchronous>, transform_indices = @transform_1, window_bounds = array<i64: 16, 800>}, {pipeline_mode = #tpu.pipeline_mode<synchronous>, transform_indices = @transform_2, window_bounds = array<i64: 1, 800>}, {pipeline_mode = #tpu.pipeline_mode<synchronous>, transform_indices = @transform_3, window_bounds = array<i64: 800, 600>}, {pipeline_mode = #tpu.pipeline_mode<synchronous>, transform_indices = @transform_4, window_bounds = array<i64: 1, 600>}, {pipeline_mode = #tpu.pipeline_mode<synchronous>, transform_indices = @transform_5, window_bounds = array<i64: 600, 128>}, {pipeline_mode = #tpu.pipeline_mode<synchronous>, transform_indices = @transform_6, window_bounds = array<i64: 1, 128>}, {transform_indices = @transform_7, window_bounds = array<i64: 8, 128>}]} {
    %c0 = arith.constant 0 : index
    %c0_0 = arith.constant 0 : index
    %0 = vector.load %arg1[%c0, %c0_0] : memref<8x16xf32, #tpu.memory_space<vmem>>, vector<8x16xf32>
    %1 = arith.truncf %0 : vector<8x16xf32> to vector<8x16xbf16>
    %c0_1 = arith.constant 0 : index
    %c0_2 = arith.constant 0 : index
    %2 = vector.load %arg2[%c0_1, %c0_2] : memref<16x800xbf16, #tpu.memory_space<vmem>>, vector<16x800xbf16>
    %cst = arith.constant dense<0.000000e+00> : vector<8x800xf32>
    %3 = tpu.matmul %1, %2, %cst {dimension_numbers = #tpu.dot_dimension_numbers<[1], [0], [0], [1], [0, 0, 1, 1], [], []>} : vector<8x16xbf16>, vector<16x800xbf16>, vector<8x800xf32> -> vector<8x800xf32>
    %c0_3 = arith.constant 0 : index
    %c0_4 = arith.constant 0 : index
    %4 = vector.load %arg3[%c0_3, %c0_4] : memref<1x800xf32, #tpu.memory_space<vmem>>, vector<1x800xf32>
    %5 = vector.broadcast %4 : vector<1x800xf32> to vector<8x800xf32>
    %6 = arith.addf %3, %5 : vector<8x800xf32>
    %cst_5 = arith.constant 0.000000e+00 : f32
    %7 = vector.broadcast %cst_5 : f32 to vector<8x800xf32>
    %8 = arith.maximumf %6, %7 : vector<8x800xf32>
    %9 = arith.truncf %8 : vector<8x800xf32> to vector<8x800xbf16>
    %c0_6 = arith.constant 0 : index
    %c0_7 = arith.constant 0 : index
    %10 = vector.load %arg4[%c0_6, %c0_7] : memref<800x600xbf16, #tpu.memory_space<vmem>>, vector<800x600xbf16>
    %cst_8 = arith.constant dense<0.000000e+00> : vector<8x600xf32>
    %11 = tpu.matmul %9, %10, %cst_8 {dimension_numbers = #tpu.dot_dimension_numbers<[1], [0], [0], [1], [0, 0, 1, 1], [], []>} : vector<8x800xbf16>, vector<800x600xbf16>, vector<8x600xf32> -> vector<8x600xf32>
    %c0_9 = arith.constant 0 : index
    %c0_10 = arith.constant 0 : index
    %12 = vector.load %arg5[%c0_9, %c0_10] : memref<1x600xf32, #tpu.memory_space<vmem>>, vector<1x600xf32>
    %13 = vector.broadcast %12 : vector<1x600xf32> to vector<8x600xf32>
    %14 = arith.addf %11, %13 : vector<8x600xf32>
    %cst_11 = arith.constant 0.000000e+00 : f32
    %15 = vector.broadcast %cst_11 : f32 to vector<8x600xf32>
    %16 = arith.maximumf %14, %15 : vector<8x600xf32>
    %17 = arith.truncf %16 : vector<8x600xf32> to vector<8x600xbf16>
    %c0_12 = arith.constant 0 : index
    %c0_13 = arith.constant 0 : index
    %18 = vector.load %arg6[%c0_12, %c0_13] : memref<600x128xbf16, #tpu.memory_space<vmem>>, vector<600x128xbf16>
    %cst_14 = arith.constant dense<0.000000e+00> : vector<8x128xf32>
    %19 = tpu.matmul %17, %18, %cst_14 {dimension_numbers = #tpu.dot_dimension_numbers<[1], [0], [0], [1], [0, 0, 1, 1], [], []>} : vector<8x600xbf16>, vector<600x128xbf16>, vector<8x128xf32> -> vector<8x128xf32>
    %c0_15 = arith.constant 0 : index
    %c0_16 = arith.constant 0 : index
    %20 = vector.load %arg7[%c0_15, %c0_16] : memref<1x128xf32, #tpu.memory_space<vmem>>, vector<1x128xf32>
    %21 = vector.broadcast %20 : vector<1x128xf32> to vector<8x128xf32>
    %22 = arith.addf %19, %21 : vector<8x128xf32>
    %c0_17 = arith.constant 0 : index
    %c0_18 = arith.constant 0 : index
    %23 = vector.load %arg8[%c0_17, %c0_18] : memref<8x128xf32, #tpu.memory_space<vmem>>, vector<8x128xf32>
    tpu.vector_store %arg8[%c0_17, %c0_18], %22 {strides = array<i32>} : memref<8x128xf32, #tpu.memory_space<vmem>>, vector<8x128xf32>,
    return
  }
  func.func @transform_0(%arg0: i32) -> (i32, i32) {
    %c0_i32 = arith.constant 0 : i32
    %c0_i32_0 = arith.constant 0 : i32
    return %arg0, %c0_i32 : i32, i32
  }
  func.func @transform_1(%arg0: i32) -> (i32, i32) {
    %c0_i32 = arith.constant 0 : i32
    %c0_i32_0 = arith.constant 0 : i32
    %c0_i32_1 = arith.constant 0 : i32
    return %c0_i32, %c0_i32_0 : i32, i32
  }
  func.func @transform_2(%arg0: i32) -> (i32, i32) {
    %c0_i32 = arith.constant 0 : i32
    %c0_i32_0 = arith.constant 0 : i32
    %c0_i32_1 = arith.constant 0 : i32
    return %c0_i32, %c0_i32_0 : i32, i32
  }
  func.func @transform_3(%arg0: i32) -> (i32, i32) {
    %c0_i32 = arith.constant 0 : i32
    %c0_i32_0 = arith.constant 0 : i32
    %c0_i32_1 = arith.constant 0 : i32
    return %c0_i32, %c0_i32_0 : i32, i32
  }
  func.func @transform_4(%arg0: i32) -> (i32, i32) {
    %c0_i32 = arith.constant 0 : i32
    %c0_i32_0 = arith.constant 0 : i32
    %c0_i32_1 = arith.constant 0 : i32
    return %c0_i32, %c0_i32_0 : i32, i32
  }
  func.func @transform_5(%arg0: i32) -> (i32, i32) {
    %c0_i32 = arith.constant 0 : i32
    %c0_i32_0 = arith.constant 0 : i32
    %c0_i32_1 = arith.constant 0 : i32
    return %c0_i32, %c0_i32_0 : i32, i32
  }
  func.func @transform_6(%arg0: i32) -> (i32, i32) {
    %c0_i32 = arith.constant 0 : i32
    %c0_i32_0 = arith.constant 0 : i32
    %c0_i32_1 = arith.constant 0 : i32
    return %c0_i32, %c0_i32_0 : i32, i32
  }
  func.func @transform_7(%arg0: i32) -> (i32, i32) {
    %c0_i32 = arith.constant 0 : i32
    %c0_i32_0 = arith.constant 0 : i32
    return %arg0, %c0_i32 : i32, i32
  }
}

</mosaic_0001>

<llo_original>
// kernel: qnetwork_forward.1
$region0: #{qnetwork_forward.1}
  #allocation0 [shape = 'u32[]', space=smem, size = 0x4, offset = 0x4, fixed_abs, tag = 'smem constant byte address 0x4 - core index']
  #allocation1 [shape = 'u32[144,128]{1,0:T(1,128)}', space=vmem, size = 0x12000, scoped, tag = 'internal scratch']
  %s0 = inlined_call_operand.vmem [shape: f32[8,16], index: 0, kind: input, shape index: {}]
  %s1 = inlined_call_operand.hbm [shape: bf16[16,800], index: 1, kind: input, shape index: {}]
  %s2 = inlined_call_operand.vmem [shape: f32[1,800], index: 2, kind: input, shape index: {}]
  %s3 = inlined_call_operand.hbm [shape: bf16[800,600], index: 3, kind: input, shape index: {}]
  %s4 = inlined_call_operand.vmem [shape: f32[1,600], index: 4, kind: input, shape index: {}]
  %s5 = inlined_call_operand.hbm [shape: bf16[600,128], index: 5, kind: input, shape index: {}]
  %s6 = inlined_call_operand.vmem [shape: f32[1,128], index: 6, kind: input, shape index: {}]
  %s7 = inlined_call_operand.vmem [shape: f32[8,128], index: 7, kind: output, shape index: {}]
  %s8 = sld [smem:[#allocation0]]
  $region50: #{qnetwork_forward.1} parent=0
    _
  %s10 = ssub.s32 1, %s8
  %s11 = scalar_select 0, %s10, %s8
  $region1: #{qnetwork_forward.1} parent=0
    #allocation2 [shape = 'u8[28672]{0}', space=vmem, size = 0x7000, scoped, tag = 'input window, operand 1, single buffered']
    #allocation3 [shape = 's32[1]{0}', space=sflag, size = 0x4, scoped, tag = 'scoped memory for qnetwork_forward.1']
    #allocation4 [shape = 'u8[1024000]{0}', space=vmem, size = 0xfa000, scoped, tag = 'input window, operand 3, single buffered']
    #allocation5 [shape = 's32[1]{0}', space=sflag, size = 0x4, scoped, tag = 'scoped memory for qnetwork_forward.1']
    #allocation6 [shape = 'u8[153600]{0}', space=vmem, size = 0x25800, scoped, tag = 'input window, operand 5, single buffered']
    %12 = vsyncpa [#allocation3], 0
    %13 = vsyncpa [#allocation5], 0
    // Predicated region
    $region2: #{qnetwork_forward.1} parent=1 // pred_check
      _
    $region3: #{qnetwork_forward.1} parent=1 // pred_check_branch
      %15 = sbr.rel (0) target = $region5
    $region4: #{qnetwork_forward.1} parent=1 // pred_region
      _
    $region5: #{qnetwork_forward.1} parent=1 // pred_fallthru
      _
    // Predicated region
    $region6: #{qnetwork_forward.1} parent=1 // pred_check
      _
    $region7: #{qnetwork_forward.1} parent=1 // pred_check_branch
      %17 = sbr.rel (0) target = $region9
    $region8: #{qnetwork_forward.1} parent=1 // pred_region
      %s19 = ssub.s32 896, 896
      %20 = vsyncadd [#allocation3], %s19
      %s21 = sshll.u32 [#allocation2], 4
      %s22 = int_to_ptr.vmem [resolvable:$true] %s21
      %27 = dma.hbm_to_vmem [thread:$0]  %s1, 896, %s22, [#allocation3], 448, 448, 28
    $region9: #{qnetwork_forward.1} parent=1 // pred_fallthru
      _
    // Predicated region
    $region10: #{qnetwork_forward.1} parent=1 // pred_check
      _
    $region11: #{qnetwork_forward.1} parent=1 // pred_check_branch
      %29 = sbr.rel (0) target = $region13
    $region12: #{qnetwork_forward.1} parent=1 // pred_region
      _
    $region13: #{qnetwork_forward.1} parent=1 // pred_fallthru
      _
    // Predicated region
    $region14: #{qnetwork_forward.1} parent=1 // pred_check
      _
    $region15: #{qnetwork_forward.1} parent=1 // pred_check_branch
      %31 = sbr.rel (0) target = $region17
    $region16: #{qnetwork_forward.1} parent=1 // pred_region
      %s33 = ssub.s32 32000, 32000
      %34 = vsyncadd [#allocation5], %s33
      %s35 = sshll.u32 [#allocation4], 4
      %s36 = int_to_ptr.vmem [resolvable:$true] %s35
      %41 = dma.hbm_to_vmem [thread:$0]  %s3, 32000, %s36, [#allocation5], 320, 320, 20
    $region17: #{qnetwork_forward.1} parent=1 // pred_fallthru
      _
    // Predicated region
    $region18: #{qnetwork_forward.1} parent=1 // pred_check
      _
    $region19: #{qnetwork_forward.1} parent=1 // pred_check_branch
      %43 = sbr.rel (0) target = $region21
    $region20: #{qnetwork_forward.1} parent=1 // pred_region
      _
    $region21: #{qnetwork_forward.1} parent=1 // pred_fallthru
      _
    // Predicated region
    $region22: #{qnetwork_forward.1} parent=1 // pred_check
      _
    $region23: #{qnetwork_forward.1} parent=1 // pred_check_branch
      %45 = sbr.rel (0) target = $region25
    $region24: #{qnetwork_forward.1} parent=1 // pred_region
      %s47 = ssub.s32 4800, 4800
      %48 = vsyncadd [#allocation5], %s47
      %s49 = sshll.u32 [#allocation6], 4
      %s50 = int_to_ptr.vmem [resolvable:$true] %s49
      %55 = dma.hbm_to_vmem [thread:$0]  %s5, 4800, %s50, [#allocation5], 64, 64, 4
    $region25: #{qnetwork_forward.1} parent=1 // pred_fallthru
      _
    // Predicated region
    $region26: #{qnetwork_forward.1} parent=1 // pred_check
      _
    $region27: #{qnetwork_forward.1} parent=1 // pred_check_branch
      %57 = sbr.rel (0) target = $region29
    $region28: #{qnetwork_forward.1} parent=1 // pred_region
      _
    $region29: #{qnetwork_forward.1} parent=1 // pred_fallthru
      _
    // Predicated region
    $region30: #{qnetwork_forward.1} parent=1 // pred_check
      _
    $region31: #{qnetwork_forward.1} parent=1 // pred_check_branch
      %59 = sbr.rel (0) target = $region33
    $region32: #{qnetwork_forward.1} parent=1 // pred_region
      %60 = dma.done [#allocation3], 896
    $region33: #{qnetwork_forward.1} parent=1 // pred_fallthru
      _
    // Predicated region
    $region34: #{qnetwork_forward.1} parent=1 // pred_check
      _
    $region35: #{qnetwork_forward.1} parent=1 // pred_check_branch
      %62 = sbr.rel (0) target = $region37
    $region36: #{qnetwork_forward.1} parent=1 // pred_region
      %63 = dma.done [#allocation5], 32000
    $region37: #{qnetwork_forward.1} parent=1 // pred_fallthru
      _
    // Predicated region
    $region38: #{qnetwork_forward.1} parent=1 // pred_check
      _
    $region39: #{qnetwork_forward.1} parent=1 // pred_check_branch
      %65 = sbr.rel (0) target = $region41
    $region40: #{qnetwork_forward.1} parent=1 // pred_region
      %66 = dma.done [#allocation5], 4800
    $region41: #{qnetwork_forward.1} parent=1 // pred_fallthru
      _
    %v68 = vld [vmem:[%s0] sm:$0xff]
    %v69 = vpack.c.bf16 %v68, %v68
    %v70 = vld [vmem:[#allocation2] sm:$0xff]
    %v71 = vld [vmem:[#allocation2 + $0x8] sm:$0xff]
    %v72 = vld [vmem:[#allocation2 + $0x10] sm:$0xff]
    %v73 = vld [vmem:[#allocation2 + $0x18] sm:$0xf]
    %v74 = vld [vmem:[#allocation2 + $0x1c] sm:$0xff]
    %v75 = vld [vmem:[#allocation2 + $0x24] sm:$0xff]
    %v76 = vld [vmem:[#allocation2 + $0x2c] sm:$0xff]
    %v77 = vld [vmem:[#allocation2 + $0x34] sm:$0xf]
    %v78 = vld [vmem:[%s2] sm:$0x7f]
    %v80 = vlaneseq
    %v81 = vshrl.u32 %v80, 7
    %v82 = vsub.s32 0, %v81
    %v83 = vrot.slane %v78, %v82
    %v84 = vlaneseq
    %v85 = vshrl.u32 %v84, 7
    %v86 = vsub.s32 1, %v85
    %v87 = vrot.slane %v78, %v86
    %v88 = vlaneseq
    %v89 = vshrl.u32 %v88, 7
    %v90 = vsub.s32 2, %v89
    %v91 = vrot.slane %v78, %v90
    %v92 = vlaneseq
    %v93 = vshrl.u32 %v92, 7
    %v94 = vsub.s32 3, %v93
    %v95 = vrot.slane %v78, %v94
    %v96 = vlaneseq
    %v97 = vshrl.u32 %v96, 7
    %v98 = vsub.s32 4, %v97
    %v99 = vrot.slane %v78, %v98
    %v100 = vlaneseq
    %v101 = vshrl.u32 %v100, 7
    %v102 = vsub.s32 5, %v101
    %v103 = vrot.slane %v78, %v102
    %v104 = vlaneseq
    %v105 = vshrl.u32 %v104, 7
    %v106 = vsub.s32 6, %v105
    %v107 = vrot.slane %v78, %v106
    %v123 = vunpack.c.l.b16 %v70
    %v124 = vunpack.c.h.b16 %v70
    %v125 = vunpack.c.l.b16 %v71
    %v126 = vunpack.c.h.b16 %v71
    %v127 = vunpack.c.l.b16 %v72
    %v128 = vunpack.c.h.b16 %v72
    %v129 = vunpack.c.l.b16 %v73
    %v130 = vunpack.c.l.b16 %v74
    %v131 = vunpack.c.h.b16 %v74
    %v132 = vunpack.c.l.b16 %v75
    %v133 = vunpack.c.h.b16 %v75
    %v134 = vunpack.c.l.b16 %v76
    %v135 = vunpack.c.h.b16 %v76
    %v136 = vunpack.c.l.b16 %v77
    %v137 = vpack.c.b16 %v130, %v123
    %v138 = vpack.c.b16 %v131, %v124
    %v139 = vpack.c.b16 %v132, %v125
    %v140 = vpack.c.b16 %v133, %v126
    %v141 = vpack.c.b16 %v134, %v127
    %v142 = vpack.c.b16 %v135, %v128
    %v143 = vpack.c.b16 %v136, %v129
    %vm151 = vcmask 130048
    %v153 = vsel %vm151, %v69, 0
    %155 = vmatprep.subr.bf16.mxu0 %v138
    %156 = vmatpush1.bf16.msra.mxu0 %v137
    %157 = vmatprep.subr.bf16.mxu0 0
    %158 = vmatpush1.bf16.msra.mxu0 0
    %159 = vmatprep.subr.bf16.mxu0 0
    %160 = vmatpush1.bf16.msra.mxu0 0
    %161 = vmatprep.subr.bf16.mxu0 0
    %162 = vmatpush1.bf16.msra.mxu0 0
    %163 = vmatprep.subr.bf16.mxu0 0
    %164 = vmatpush1.bf16.msra.mxu0 0
    %165 = vmatprep.subr.bf16.mxu0 0
    %166 = vmatpush1.bf16.msra.mxu0 0
    %167 = vmatprep.subr.bf16.mxu0 0
    %168 = vmatpush1.bf16.msra.mxu0 0
    %169 = vmatprep.subr.bf16.mxu0 0
    %170 = vmatpush1.bf16.msra.mxu0 0
    %171 = vmatprep.subr.bf16.mxu0 0
    %172 = vmatpush1.bf16.msra.mxu0 0
    %173 = vmatprep.subr.bf16.mxu0 0
    %174 = vmatpush1.bf16.msra.mxu0 0
    %175 = vmatprep.subr.bf16.mxu0 0
    %176 = vmatpush1.bf16.msra.mxu0 0
    %177 = vmatprep.subr.bf16.mxu0 0
    %178 = vmatpush1.bf16.msra.mxu0 0
    %179 = vmatprep.subr.bf16.mxu0 0
    %180 = vmatpush1.bf16.msra.mxu0 0
    %181 = vmatprep.subr.bf16.mxu0 0
    %182 = vmatpush1.bf16.msra.mxu0 0
    %183 = vmatprep.subr.bf16.mxu0 0
    %184 = vmatpush1.bf16.msra.mxu0 0
    %185 = vmatprep.subr.bf16.mxu0 0
    %186 = vmatpush1.bf16.msra.mxu0 0
    %187 = vmatprep.mubr.bf16.mxu0 0
    %188 = vmatmul.mubr.bf16.gmra.mrb[0].mxu0 %v153
    %v189 = vpop.f32.mrb[0].mxu0
    %v190 = vadd.f32 %v83, %v189
    %v191 = vpop.f32.mrb[0].mxu0
    %v192 = vadd.f32 %v87, %v191
    %v193 = vpop.f32.mrb[0].mxu0
    %v194 = vpop.f32.mrb[0].mxu0
    %195 = vdwg.mxu0
    %196 = vmatprep.subr.bf16.mxu0 %v140
    %197 = vmatpush1.bf16.msra.mxu0 %v139
    %198 = vmatprep.subr.bf16.mxu0 0
    %199 = vmatpush1.bf16.msra.mxu0 0
    %200 = vmatprep.subr.bf16.mxu0 0
    %201 = vmatpush1.bf16.msra.mxu0 0
    %202 = vmatprep.subr.bf16.mxu0 0
    %203 = vmatpush1.bf16.msra.mxu0 0
    %204 = vmatprep.subr.bf16.mxu0 0
    %205 = vmatpush1.bf16.msra.mxu0 0
    %206 = vmatprep.subr.bf16.mxu0 0
    %207 = vmatpush1.bf16.msra.mxu0 0
    %208 = vmatprep.subr.bf16.mxu0 0
    %209 = vmatpush1.bf16.msra.mxu0 0
    %210 = vmatprep.subr.bf16.mxu0 0
    %211 = vmatpush1.bf16.msra.mxu0 0
    %212 = vmatprep.subr.bf16.mxu0 0
    %213 = vmatpush1.bf16.msra.mxu0 0
    %214 = vmatprep.subr.bf16.mxu0 0
    %215 = vmatpush1.bf16.msra.mxu0 0
    %216 = vmatprep.subr.bf16.mxu0 0
    %217 = vmatpush1.bf16.msra.mxu0 0
    %218 = vmatprep.subr.bf16.mxu0 0
    %219 = vmatpush1.bf16.msra.mxu0 0
    %220 = vmatprep.subr.bf16.mxu0 0
    %221 = vmatpush1.bf16.msra.mxu0 0
    %222 = vmatprep.subr.bf16.mxu0 0
    %223 = vmatpush1.bf16.msra.mxu0 0
    %224 = vmatprep.subr.bf16.mxu0 0
    %225 = vmatpush1.bf16.msra.mxu0 0
    %226 = vmatprep.subr.bf16.mxu0 0
    %227 = vmatpush1.bf16.msra.mxu0 0
    %228 = vmatprep.mubr.bf16.mxu0 0
    %229 = vmatmul.mubr.bf16.gmra.mrb[0].mxu0 %v153
    %v230 = vpop.f32.mrb[0].mxu0
    %v231 = vadd.f32 %v91, %v230
    %v232 = vpop.f32.mrb[0].mxu0
    %v233 = vadd.f32 %v95, %v232
    %v234 = vpop.f32.mrb[0].mxu0
    %v235 = vpop.f32.mrb[0].mxu0
    %236 = vdwg.mxu0
    %237 = vmatprep.subr.bf16.mxu0 %v142
    %238 = vmatpush1.bf16.msra.mxu0 %v141
    %239 = vmatprep.subr.bf16.mxu0 0
    %240 = vmatpush1.bf16.msra.mxu0 0
    %241 = vmatprep.subr.bf16.mxu0 0
    %242 = vmatpush1.bf16.msra.mxu0 0
    %243 = vmatprep.subr.bf16.mxu0 0
    %244 = vmatpush1.bf16.msra.mxu0 0
    %245 = vmatprep.subr.bf16.mxu0 0
    %246 = vmatpush1.bf16.msra.mxu0 0
    %247 = vmatprep.subr.bf16.mxu0 0
    %248 = vmatpush1.bf16.msra.mxu0 0
    %249 = vmatprep.subr.bf16.mxu0 0
    %250 = vmatpush1.bf16.msra.mxu0 0
    %251 = vmatprep.subr.bf16.mxu0 0
    %252 = vmatpush1.bf16.msra.mxu0 0
    %253 = vmatprep.subr.bf16.mxu0 0
    %254 = vmatpush1.bf16.msra.mxu0 0
    %255 = vmatprep.subr.bf16.mxu0 0
    %256 = vmatpush1.bf16.msra.mxu0 0
    %257 = vmatprep.subr.bf16.mxu0 0
    %258 = vmatpush1.bf16.msra.mxu0 0
    %259 = vmatprep.subr.bf16.mxu0 0
    %260 = vmatpush1.bf16.msra.mxu0 0
    %261 = vmatprep.subr.bf16.mxu0 0
    %262 = vmatpush1.bf16.msra.mxu0 0
    %263 = vmatprep.subr.bf16.mxu0 0
    %264 = vmatpush1.bf16.msra.mxu0 0
    %265 = vmatprep.subr.bf16.mxu0 0
    %266 = vmatpush1.bf16.msra.mxu0 0
    %267 = vmatprep.subr.bf16.mxu0 0
    %268 = vmatpush1.bf16.msra.mxu0 0
    %269 = vmatprep.mubr.bf16.mxu0 0
    %270 = vmatmul.mubr.bf16.gmra.mrb[0].mxu0 %v153
    %v271 = vpop.f32.mrb[0].mxu0
    %v272 = vadd.f32 %v99, %v271
    %v273 = vpop.f32.mrb[0].mxu0
    %v274 = vadd.f32 %v103, %v273
    %v275 = vpop.f32.mrb[0].mxu0
    %v276 = vpop.f32.mrb[0].mxu0
    %277 = vdwg.mxu0
    %278 = vmatprep.subr.bf16.mxu0 0
    %279 = vmatpush1.bf16.msra.mxu0 %v143
    %280 = vmatprep.subr.bf16.mxu0 0
    %281 = vmatpush1.bf16.msra.mxu0 0
    %282 = vmatprep.subr.bf16.mxu0 0
    %283 = vmatpush1.bf16.msra.mxu0 0
    %284 = vmatprep.subr.bf16.mxu0 0
    %285 = vmatpush1.bf16.msra.mxu0 0
    %286 = vmatprep.subr.bf16.mxu0 0
    %287 = vmatpush1.bf16.msra.mxu0 0
    %288 = vmatprep.subr.bf16.mxu0 0
    %289 = vmatpush1.bf16.msra.mxu0 0
    %290 = vmatprep.subr.bf16.mxu0 0
    %291 = vmatpush1.bf16.msra.mxu0 0
    %292 = vmatprep.subr.bf16.mxu0 0
    %293 = vmatpush1.bf16.msra.mxu0 0
    %294 = vmatprep.subr.bf16.mxu0 0
    %295 = vmatpush1.bf16.msra.mxu0 0
    %296 = vmatprep.subr.bf16.mxu0 0
    %297 = vmatpush1.bf16.msra.mxu0 0
    %298 = vmatprep.subr.bf16.mxu0 0
    %299 = vmatpush1.bf16.msra.mxu0 0
    %300 = vmatprep.subr.bf16.mxu0 0
    %301 = vmatpush1.bf16.msra.mxu0 0
    %302 = vmatprep.subr.bf16.mxu0 0
    %303 = vmatpush1.bf16.msra.mxu0 0
    %304 = vmatprep.subr.bf16.mxu0 0
    %305 = vmatpush1.bf16.msra.mxu0 0
    %306 = vmatprep.subr.bf16.mxu0 0
    %307 = vmatpush1.bf16.msra.mxu0 0
    %308 = vmatprep.subr.bf16.mxu0 0
    %309 = vmatpush1.bf16.msra.mxu0 0
    %310 = vmatprep.mubr.bf16.mxu0 0
    %311 = vmatmul.mubr.bf16.gmra.mrb[0].mxu0 %v153
    %v312 = vpop.f32.mrb[0].mxu0
    %v313 = vadd.f32 %v107, %v312
    %v314 = vpop.f32.mrb[0].mxu0
    %v315 = vpop.f32.mrb[0].mxu0
    %v316 = vpop.f32.mrb[0].mxu0
    %317 = vdwg.mxu0
    %v318 = vmax.f32 %v190, 0.0
    %v319 = vmax.f32 %v192, 0.0
    %v320 = vmax.f32 %v231, 0.0
    %v321 = vmax.f32 %v233, 0.0
    %v322 = vmax.f32 %v272, 0.0
    %v323 = vmax.f32 %v274, 0.0
    %v324 = vmax.f32 %v313, 0.0
    %v325 = vpack.c.bf16 %v318, %v318
    %v326 = vpack.c.bf16 %v319, %v319
    %v327 = vpack.c.bf16 %v320, %v320
    %v328 = vpack.c.bf16 %v321, %v321
    %v329 = vpack.c.bf16 %v322, %v322
    %v330 = vpack.c.bf16 %v323, %v323
    %v331 = vpack.c.bf16 %v324, %v324
    %v332 = vld [vmem:[#allocation4] sm:$0xff]
    %v333 = vld [vmem:[#allocation4 + $0x8] sm:$0xff]
    %v334 = vld [vmem:[#allocation4 + $0x10] sm:$0xf]
    %v335 = vld [vmem:[#allocation4 + $0x14] sm:$0xff]
    %v336 = vld [vmem:[#allocation4 + $0x1c] sm:$0xff]
    %v337 = vld [vmem:[#allocation4 + $0x24] sm:$0xf]
    %v338 = vld [vmem:[#allocation4 + $0x28] sm:$0xff]
    %v339 = vld [vmem:[#allocation4 + $0x30] sm:$0xff]
    %v340 = vld [vmem:[#allocation4 + $0x38] sm:$0xf]
    %v341 = vld [vmem:[#allocation4 + $0x3c] sm:$0xff]
    %v342 = vld [vmem:[#allocation4 + $0x44] sm:$0xff]
    %v343 = vld [vmem:[#allocation4 + $0x4c] sm:$0xf]
    %v344 = vld [vmem:[#allocation4 + $0x50] sm:$0xff]
    %v345 = vld [vmem:[#allocation4 + $0x58] sm:$0xff]
    %v346 = vld [vmem:[#allocation4 + $0x60] sm:$0xf]
    %v347 = vld [vmem:[#allocation4 + $0x64] sm:$0xff]
    %v348 = vld [vmem:[#allocation4 + $0x6c] sm:$0xff]
    %v349 = vld [vmem:[#allocation4 + $0x74] sm:$0xf]
    %v350 = vld [vmem:[#allocation4 + $0x78] sm:$0xff]
    %v351 = vld [vmem:[#allocation4 + $0x80] sm:$0xff]
    %v352 = vld [vmem:[#allocation4 + $0x88] sm:$0xf]
    %v353 = vld [vmem:[#allocation4 + $0x8c] sm:$0xff]
    %v354 = vld [vmem:[#allocation4 + $0x94] sm:$0xff]
    %v355 = vld [vmem:[#allocation4 + $0x9c] sm:$0xf]
    %v356 = vld [vmem:[#allocation4 + $0xa0] sm:$0xff]
    %v357 = vld [vmem:[#allocation4 + $0xa8] sm:$0xff]
    %v358 = vld [vmem:[#allocation4 + $0xb0] sm:$0xf]
    %v359 = vld [vmem:[#allocation4 + $0xb4] sm:$0xff]
    %v360 = vld [vmem:[#allocation4 + $0xbc] sm:$0xff]
    %v361 = vld [vmem:[#allocation4 + $0xc4] sm:$0xf]
    %v362 = vld [vmem:[#allocation4 + $0xc8] sm:$0xff]
    %v363 = vld [vmem:[#allocation4 + $0xd0] sm:$0xff]
    %v364 = vld [vmem:[#allocation4 + $0xd8] sm:$0xf]
    %v365 = vld [vmem:[#allocation4 + $0xdc] sm:$0xff]
    %v366 = vld [vmem:[#allocation4 + $0xe4] sm:$0xff]
    %v367 = vld [vmem:[#allocation4 + $0xec] sm:$0xf]
    %v368 = vld [vmem:[#allocation4 + $0xf0] sm:$0xff]
    %v369 = vld [vmem:[#allocation4 + $0xf8] sm:$0xff]
    %v370 = vld [vmem:[#allocation4 + $0x100] sm:$0xf]
    %v371 = vld [vmem:[#allocation4 + $0x104] sm:$0xff]
    %v372 = vld [vmem:[#allocation4 + $0x10c] sm:$0xff]
    %v373 = vld [vmem:[#allocation4 + $0x114] sm:$0xf]
    %v374 = vld [vmem:[#allocation4 + $0x118] sm:$0xff]
    %v375 = vld [vmem:[#allocation4 + $0x120] sm:$0xff]
    %v376 = vld [vmem:[#allocation4 + $0x128] sm:$0xf]
    %v377 = vld [vmem:[#allocation4 + $0x12c] sm:$0xff]
    %v378 = vld [vmem:[#allocation4 + $0x134] sm:$0xff]
    %v379 = vld [vmem:[#allocation4 + $0x13c] sm:$0xf]
    %v380 = vld [vmem:[#allocation4 + $0x140] sm:$0xff]
    %v381 = vld [vmem:[#allocation4 + $0x148] sm:$0xff]
    %v382 = vld [vmem:[#allocation4 + $0x150] sm:$0xf]
    %v383 = vld [vmem:[#allocation4 + $0x154] sm:$0xff]
    %v384 = vld [vmem:[#allocation4 + $0x15c] sm:$0xff]
    %v385 = vld [vmem:[#allocation4 + $0x164] sm:$0xf]
    %v386 = vld [vmem:[#allocation4 + $0x168] sm:$0xff]
    %v387 = vld [vmem:[#allocation4 + $0x170] sm:$0xff]
    %v388 = vld [vmem:[#allocation4 + $0x178] sm:$0xf]
    %v389 = vld [vmem:[#allocation4 + $0x17c] sm:$0xff]
    %v390 = vld [vmem:[#allocation4 + $0x184] sm:$0xff]
    %v391 = vld [vmem:[#allocation4 + $0x18c] sm:$0xf]
    %v392 = vld [vmem:[#allocation4 + $0x190] sm:$0xff]
    %v393 = vld [vmem:[#allocation4 + $0x198] sm:$0xff]
    %v394 = vld [vmem:[#allocation4 + $0x1a0] sm:$0xf]
    %v395 = vld [vmem:[#allocation4 + $0x1a4] sm:$0xff]
    %v396 = vld [vmem:[#allocation4 + $0x1ac] sm:$0xff]
    %v397 = vld [vmem:[#allocation4 + $0x1b4] sm:$0xf]
    %v398 = vld [vmem:[#allocation4 + $0x1b8] sm:$0xff]
    %v399 = vld [vmem:[#allocation4 + $0x1c0] sm:$0xff]
    %v400 = vld [vmem:[#allocation4 + $0x1c8] sm:$0xf]
    %v401 = vld [vmem:[#allocation4 + $0x1cc] sm:$0xff]
    %v402 = vld [vmem:[#allocation4 + $0x1d4] sm:$0xff]
    %v403 = vld [vmem:[#allocation4 + $0x1dc] sm:$0xf]
    %v404 = vld [vmem:[#allocation4 + $0x1e0] sm:$0xff]
    %v405 = vld [vmem:[#allocation4 + $0x1e8] sm:$0xff]
    %v406 = vld [vmem:[#allocation4 + $0x1f0] sm:$0xf]
    %v407 = vld [vmem:[#allocation4 + $0x1f4] sm:$0xff]
    %v408 = vld [vmem:[#allocation4 + $0x1fc] sm:$0xff]
    %v409 = vld [vmem:[#allocation4 + $0x204] sm:$0xf]
    %v410 = vld [vmem:[#allocation4 + $0x208] sm:$0xff]
    %v411 = vld [vmem:[#allocation4 + $0x210] sm:$0xff]
    %v412 = vld [vmem:[#allocation4 + $0x218] sm:$0xf]
    %v413 = vld [vmem:[#allocation4 + $0x21c] sm:$0xff]
    %v414 = vld [vmem:[#allocation4 + $0x224] sm:$0xff]
    %v415 = vld [vmem:[#allocation4 + $0x22c] sm:$0xf]
    %v416 = vld [vmem:[#allocation4 + $0x230] sm:$0xff]
    %v417 = vld [vmem:[#allocation4 + $0x238] sm:$0xff]
    %v418 = vld [vmem:[#allocation4 + $0x240] sm:$0xf]
    %v419 = vld [vmem:[#allocation4 + $0x244] sm:$0xff]
    %v420 = vld [vmem:[#allocation4 + $0x24c] sm:$0xff]
    %v421 = vld [vmem:[#allocation4 + $0x254] sm:$0xf]
    %v422 = vld [vmem:[#allocation4 + $0x258] sm:$0xff]
    %v423 = vld [vmem:[#allocation4 + $0x260] sm:$0xff]
    %v424 = vld [vmem:[#allocation4 + $0x268] sm:$0xf]
    %v425 = vld [vmem:[#allocation4 + $0x26c] sm:$0xff]
    %v426 = vld [vmem:[#allocation4 + $0x274] sm:$0xff]
    %v427 = vld [vmem:[#allocation4 + $0x27c] sm:$0xf]
    %v428 = vld [vmem:[#allocation4 + $0x280] sm:$0xff]
    %v429 = vld [vmem:[#allocation4 + $0x288] sm:$0xff]
    %v430 = vld [vmem:[#allocation4 + $0x290] sm:$0xf]
    %v431 = vld [vmem:[#allocation4 + $0x294] sm:$0xff]
    %v432 = vld [vmem:[#allocation4 + $0x29c] sm:$0xff]
    %v433 = vld [vmem:[#allocation4 + $0x2a4] sm:$0xf]
    %v434 = vld [vmem:[#allocation4 + $0x2a8] sm:$0xff]
    %v435 = vld [vmem:[#allocation4 + $0x2b0] sm:$0xff]
    %v436 = vld [vmem:[#allocation4 + $0x2b8] sm:$0xf]
    %v437 = vld [vmem:[#allocation4 + $0x2bc] sm:$0xff]
    %v438 = vld [vmem:[#allocation4 + $0x2c4] sm:$0xff]
    %v439 = vld [vmem:[#allocation4 + $0x2cc] sm:$0xf]
    %v440 = vld [vmem:[#allocation4 + $0x2d0] sm:$0xff]
    %v441 = vld [vmem:[#allocation4 + $0x2d8] sm:$0xff]
    %v442 = vld [vmem:[#allocation4 + $0x2e0] sm:$0xf]
    %v443 = vld [vmem:[#allocation4 + $0x2e4] sm:$0xff]
    %v444 = vld [vmem:[#allocation4 + $0x2ec] sm:$0xff]
    %v445 = vld [vmem:[#allocation4 + $0x2f4] sm:$0xf]
    %v446 = vld [vmem:[#allocation4 + $0x2f8] sm:$0xff]
    %v447 = vld [vmem:[#allocation4 + $0x300] sm:$0xff]
    %v448 = vld [vmem:[#allocation4 + $0x308] sm:$0xf]
    %v449 = vld [vmem:[#allocation4 + $0x30c] sm:$0xff]
    %v450 = vld [vmem:[#allocation4 + $0x314] sm:$0xff]
    %v451 = vld [vmem:[#allocation4 + $0x31c] sm:$0xf]
    %v452 = vld [vmem:[#allocation4 + $0x320] sm:$0xff]
    %v453 = vld [vmem:[#allocation4 + $0x328] sm:$0xff]
    %v454 = vld [vmem:[#allocation4 + $0x330] sm:$0xf]
    %v455 = vld [vmem:[#allocation4 + $0x334] sm:$0xff]
    %v456 = vld [vmem:[#allocation4 + $0x33c] sm:$0xff]
    %v457 = vld [vmem:[#allocation4 + $0x344] sm:$0xf]
    %v458 = vld [vmem:[#allocation4 + $0x348] sm:$0xff]
    %v459 = vld [vmem:[#allocation4 + $0x350] sm:$0xff]
    %v460 = vld [vmem:[#allocation4 + $0x358] sm:$0xf]
    %v461 = vld [vmem:[#allocation4 + $0x35c] sm:$0xff]
    %v462 = vld [vmem:[#allocation4 + $0x364] sm:$0xff]
    %v463 = vld [vmem:[#allocation4 + $0x36c] sm:$0xf]
    %v464 = vld [vmem:[#allocation4 + $0x370] sm:$0xff]
    %v465 = vld [vmem:[#allocation4 + $0x378] sm:$0xff]
    %v466 = vld [vmem:[#allocation4 + $0x380] sm:$0xf]
    %v467 = vld [vmem:[#allocation4 + $0x384] sm:$0xff]
    %v468 = vld [vmem:[#allocation4 + $0x38c] sm:$0xff]
    %v469 = vld [vmem:[#allocation4 + $0x394] sm:$0xf]
    %v470 = vld [vmem:[#allocation4 + $0x398] sm:$0xff]
    %v471 = vld [vmem:[#allocation4 + $0x3a0] sm:$0xff]
    %v472 = vld [vmem:[#allocation4 + $0x3a8] sm:$0xf]
    %v473 = vld [vmem:[#allocation4 + $0x3ac] sm:$0xff]
    %v474 = vld [vmem:[#allocation4 + $0x3b4] sm:$0xff]
    %v475 = vld [vmem:[#allocation4 + $0x3bc] sm:$0xf]
    %v476 = vld [vmem:[#allocation4 + $0x3c0] sm:$0xff]
    %v477 = vld [vmem:[#allocation4 + $0x3c8] sm:$0xff]
    %v478 = vld [vmem:[#allocation4 + $0x3d0] sm:$0xf]
    %v479 = vld [vmem:[#allocation4 + $0x3d4] sm:$0xff]
    %v480 = vld [vmem:[#allocation4 + $0x3dc] sm:$0xff]
    %v481 = vld [vmem:[#allocation4 + $0x3e4] sm:$0xf]
    %v482 = vld [vmem:[#allocation4 + $0x3e8] sm:$0xff]
    %v483 = vld [vmem:[#allocation4 + $0x3f0] sm:$0xff]
    %v484 = vld [vmem:[#allocation4 + $0x3f8] sm:$0xf]
    %v485 = vld [vmem:[#allocation4 + $0x3fc] sm:$0xff]
    %v486 = vld [vmem:[#allocation4 + $0x404] sm:$0xff]
    %v487 = vld [vmem:[#allocation4 + $0x40c] sm:$0xf]
    %v488 = vld [vmem:[#allocation4 + $0x410] sm:$0xff]
    %v489 = vld [vmem:[#allocation4 + $0x418] sm:$0xff]
    %v490 = vld [vmem:[#allocation4 + $0x420] sm:$0xf]
    %v491 = vld [vmem:[#allocation4 + $0x424] sm:$0xff]
    %v492 = vld [vmem:[#allocation4 + $0x42c] sm:$0xff]
    %v493 = vld [vmem:[#allocation4 + $0x434] sm:$0xf]
    %v494 = vld [vmem:[#allocation4 + $0x438] sm:$0xff]
    %v495 = vld [vmem:[#allocation4 + $0x440] sm:$0xff]
    %v496 = vld [vmem:[#allocation4 + $0x448] sm:$0xf]
    %v497 = vld [vmem:[#allocation4 + $0x44c] sm:$0xff]
    %v498 = vld [vmem:[#allocation4 + $0x454] sm:$0xff]
    %v499 = vld [vmem:[#allocation4 + $0x45c] sm:$0xf]
    %v500 = vld [vmem:[#allocation4 + $0x460] sm:$0xff]
    %v501 = vld [vmem:[#allocation4 + $0x468] sm:$0xff]
    %v502 = vld [vmem:[#allocation4 + $0x470] sm:$0xf]
    %v503 = vld [vmem:[#allocation4 + $0x474] sm:$0xff]
    %v504 = vld [vmem:[#allocation4 + $0x47c] sm:$0xff]
    %v505 = vld [vmem:[#allocation4 + $0x484] sm:$0xf]
    %v506 = vld [vmem:[#allocation4 + $0x488] sm:$0xff]
    %v507 = vld [vmem:[#allocation4 + $0x490] sm:$0xff]
    %v508 = vld [vmem:[#allocation4 + $0x498] sm:$0xf]
    %v509 = vld [vmem:[#allocation4 + $0x49c] sm:$0xff]
    %v510 = vld [vmem:[#allocation4 + $0x4a4] sm:$0xff]
    %v511 = vld [vmem:[#allocation4 + $0x4ac] sm:$0xf]
    %v512 = vld [vmem:[#allocation4 + $0x4b0] sm:$0xff]
    %v513 = vld [vmem:[#allocation4 + $0x4b8] sm:$0xff]
    %v514 = vld [vmem:[#allocation4 + $0x4c0] sm:$0xf]
    %v515 = vld [vmem:[#allocation4 + $0x4c4] sm:$0xff]
    %v516 = vld [vmem:[#allocation4 + $0x4cc] sm:$0xff]
    %v517 = vld [vmem:[#allocation4 + $0x4d4] sm:$0xf]
    %v518 = vld [vmem:[#allocation4 + $0x4d8] sm:$0xff]
    %v519 = vld [vmem:[#allocation4 + $0x4e0] sm:$0xff]
    %v520 = vld [vmem:[#allocation4 + $0x4e8] sm:$0xf]
    %v521 = vld [vmem:[#allocation4 + $0x4ec] sm:$0xff]
    %v522 = vld [vmem:[#allocation4 + $0x4f4] sm:$0xff]
    %v523 = vld [vmem:[#allocation4 + $0x4fc] sm:$0xf]
    %v524 = vld [vmem:[#allocation4 + $0x500] sm:$0xff]
    %v525 = vld [vmem:[#allocation4 + $0x508] sm:$0xff]
    %v526 = vld [vmem:[#allocation4 + $0x510] sm:$0xf]
    %v527 = vld [vmem:[#allocation4 + $0x514] sm:$0xff]
    %v528 = vld [vmem:[#allocation4 + $0x51c] sm:$0xff]
    %v529 = vld [vmem:[#allocation4 + $0x524] sm:$0xf]
    %v530 = vld [vmem:[#allocation4 + $0x528] sm:$0xff]
    %v531 = vld [vmem:[#allocation4 + $0x530] sm:$0xff]
    %v532 = vld [vmem:[#allocation4 + $0x538] sm:$0xf]
    %v533 = vld [vmem:[#allocation4 + $0x53c] sm:$0xff]
    %v534 = vld [vmem:[#allocation4 + $0x544] sm:$0xff]
    %v535 = vld [vmem:[#allocation4 + $0x54c] sm:$0xf]
    %v536 = vld [vmem:[#allocation4 + $0x550] sm:$0xff]
    %v537 = vld [vmem:[#allocation4 + $0x558] sm:$0xff]
    %v538 = vld [vmem:[#allocation4 + $0x560] sm:$0xf]
    %v539 = vld [vmem:[#allocation4 + $0x564] sm:$0xff]
    %v540 = vld [vmem:[#allocation4 + $0x56c] sm:$0xff]
    %v541 = vld [vmem:[#allocation4 + $0x574] sm:$0xf]
    %v542 = vld [vmem:[#allocation4 + $0x578] sm:$0xff]
    %v543 = vld [vmem:[#allocation4 + $0x580] sm:$0xff]
    %v544 = vld [vmem:[#allocation4 + $0x588] sm:$0xf]
    %v545 = vld [vmem:[#allocation4 + $0x58c] sm:$0xff]
    %v546 = vld [vmem:[#allocation4 + $0x594] sm:$0xff]
    %v547 = vld [vmem:[#allocation4 + $0x59c] sm:$0xf]
    %v548 = vld [vmem:[#allocation4 + $0x5a0] sm:$0xff]
    %v549 = vld [vmem:[#allocation4 + $0x5a8] sm:$0xff]
    %v550 = vld [vmem:[#allocation4 + $0x5b0] sm:$0xf]
    %v551 = vld [vmem:[#allocation4 + $0x5b4] sm:$0xff]
    %v552 = vld [vmem:[#allocation4 + $0x5bc] sm:$0xff]
    %v553 = vld [vmem:[#allocation4 + $0x5c4] sm:$0xf]
    %v554 = vld [vmem:[#allocation4 + $0x5c8] sm:$0xff]
    %v555 = vld [vmem:[#allocation4 + $0x5d0] sm:$0xff]
    %v556 = vld [vmem:[#allocation4 + $0x5d8] sm:$0xf]
    %v557 = vld [vmem:[#allocation4 + $0x5dc] sm:$0xff]
    %v558 = vld [vmem:[#allocation4 + $0x5e4] sm:$0xff]
    %v559 = vld [vmem:[#allocation4 + $0x5ec] sm:$0xf]
    %v560 = vld [vmem:[#allocation4 + $0x5f0] sm:$0xff]
    %v561 = vld [vmem:[#allocation4 + $0x5f8] sm:$0xff]
    %v562 = vld [vmem:[#allocation4 + $0x600] sm:$0xf]
    %v563 = vld [vmem:[#allocation4 + $0x604] sm:$0xff]
    %v564 = vld [vmem:[#allocation4 + $0x60c] sm:$0xff]
    %v565 = vld [vmem:[#allocation4 + $0x614] sm:$0xf]
    %v566 = vld [vmem:[#allocation4 + $0x618] sm:$0xff]
    %v567 = vld [vmem:[#allocation4 + $0x620] sm:$0xff]
    %v568 = vld [vmem:[#allocation4 + $0x628] sm:$0xf]
    %v569 = vld [vmem:[#allocation4 + $0x62c] sm:$0xff]
    %v570 = vld [vmem:[#allocation4 + $0x634] sm:$0xff]
    %v571 = vld [vmem:[#allocation4 + $0x63c] sm:$0xf]
    %v572 = vld [vmem:[#allocation4 + $0x640] sm:$0xff]
    %v573 = vld [vmem:[#allocation4 + $0x648] sm:$0xff]
    %v574 = vld [vmem:[#allocation4 + $0x650] sm:$0xf]
    %v575 = vld [vmem:[#allocation4 + $0x654] sm:$0xff]
    %v576 = vld [vmem:[#allocation4 + $0x65c] sm:$0xff]
    %v577 = vld [vmem:[#allocation4 + $0x664] sm:$0xf]
    %v578 = vld [vmem:[#allocation4 + $0x668] sm:$0xff]
    %v579 = vld [vmem:[#allocation4 + $0x670] sm:$0xff]
    %v580 = vld [vmem:[#allocation4 + $0x678] sm:$0xf]
    %v581 = vld [vmem:[#allocation4 + $0x67c] sm:$0xff]
    %v582 = vld [vmem:[#allocation4 + $0x684] sm:$0xff]
    %v583 = vld [vmem:[#allocation4 + $0x68c] sm:$0xf]
    %v584 = vld [vmem:[#allocation4 + $0x690] sm:$0xff]
    %v585 = vld [vmem:[#allocation4 + $0x698] sm:$0xff]
    %v586 = vld [vmem:[#allocation4 + $0x6a0] sm:$0xf]
    %v587 = vld [vmem:[#allocation4 + $0x6a4] sm:$0xff]
    %v588 = vld [vmem:[#allocation4 + $0x6ac] sm:$0xff]
    %v589 = vld [vmem:[#allocation4 + $0x6b4] sm:$0xf]
    %v590 = vld [vmem:[#allocation4 + $0x6b8] sm:$0xff]
    %v591 = vld [vmem:[#allocation4 + $0x6c0] sm:$0xff]
    %v592 = vld [vmem:[#allocation4 + $0x6c8] sm:$0xf]
    %v593 = vld [vmem:[#allocation4 + $0x6cc] sm:$0xff]
    %v594 = vld [vmem:[#allocation4 + $0x6d4] sm:$0xff]
    %v595 = vld [vmem:[#allocation4 + $0x6dc] sm:$0xf]
    %v596 = vld [vmem:[#allocation4 + $0x6e0] sm:$0xff]
    %v597 = vld [vmem:[#allocation4 + $0x6e8] sm:$0xff]
    %v598 = vld [vmem:[#allocation4 + $0x6f0] sm:$0xf]
    %v599 = vld [vmem:[#allocation4 + $0x6f4] sm:$0xff]
    %v600 = vld [vmem:[#allocation4 + $0x6fc] sm:$0xff]
    %v601 = vld [vmem:[#allocation4 + $0x704] sm:$0xf]
    %v602 = vld [vmem:[#allocation4 + $0x708] sm:$0xff]
    %v603 = vld [vmem:[#allocation4 + $0x710] sm:$0xff]
    %v604 = vld [vmem:[#allocation4 + $0x718] sm:$0xf]
    %v605 = vld [vmem:[#allocation4 + $0x71c] sm:$0xff]
    %v606 = vld [vmem:[#allocation4 + $0x724] sm:$0xff]
    %v607 = vld [vmem:[#allocation4 + $0x72c] sm:$0xf]
    %v608 = vld [vmem:[#allocation4 + $0x730] sm:$0xff]
    %v609 = vld [vmem:[#allocation4 + $0x738] sm:$0xff]
    %v610 = vld [vmem:[#allocation4 + $0x740] sm:$0xf]
    %v611 = vld [vmem:[#allocation4 + $0x744] sm:$0xff]
    %v612 = vld [vmem:[#allocation4 + $0x74c] sm:$0xff]
    %v613 = vld [vmem:[#allocation4 + $0x754] sm:$0xf]
    %v614 = vld [vmem:[#allocation4 + $0x758] sm:$0xff]
    %v615 = vld [vmem:[#allocation4 + $0x760] sm:$0xff]
    %v616 = vld [vmem:[#allocation4 + $0x768] sm:$0xf]
    %v617 = vld [vmem:[#allocation4 + $0x76c] sm:$0xff]
    %v618 = vld [vmem:[#allocation4 + $0x774] sm:$0xff]
    %v619 = vld [vmem:[#allocation4 + $0x77c] sm:$0xf]
    %v620 = vld [vmem:[#allocation4 + $0x780] sm:$0xff]
    %v621 = vld [vmem:[#allocation4 + $0x788] sm:$0xff]
    %v622 = vld [vmem:[#allocation4 + $0x790] sm:$0xf]
    %v623 = vld [vmem:[#allocation4 + $0x794] sm:$0xff]
    %v624 = vld [vmem:[#allocation4 + $0x79c] sm:$0xff]
    %v625 = vld [vmem:[#allocation4 + $0x7a4] sm:$0xf]
    %v626 = vld [vmem:[#allocation4 + $0x7a8] sm:$0xff]
    %v627 = vld [vmem:[#allocation4 + $0x7b0] sm:$0xff]
    %v628 = vld [vmem:[#allocation4 + $0x7b8] sm:$0xf]
    %v629 = vld [vmem:[#allocation4 + $0x7bc] sm:$0xff]
    %v630 = vld [vmem:[#allocation4 + $0x7c4] sm:$0xff]
    %v631 = vld [vmem:[#allocation4 + $0x7cc] sm:$0xf]
    %v632 = vld [vmem:[%s4] sm:$0x1f]
    %v634 = vlaneseq
    %v635 = vshrl.u32 %v634, 7
    %v636 = vsub.s32 0, %v635
    %v637 = vrot.slane %v632, %v636
    %v638 = vlaneseq
    %v639 = vshrl.u32 %v638, 7
    %v640 = vsub.s32 1, %v639
    %v641 = vrot.slane %v632, %v640
    %v642 = vlaneseq
    %v643 = vshrl.u32 %v642, 7
    %v644 = vsub.s32 2, %v643
    %v645 = vrot.slane %v632, %v644
    %v646 = vlaneseq
    %v647 = vshrl.u32 %v646, 7
    %v648 = vsub.s32 3, %v647
    %v649 = vrot.slane %v632, %v648
    %v650 = vlaneseq
    %v651 = vshrl.u32 %v650, 7
    %v652 = vsub.s32 4, %v651
    %v653 = vrot.slane %v632, %v652
    %v959 = vunpack.c.l.b16 %v332
    %v960 = vunpack.c.h.b16 %v332
    %v961 = vunpack.c.l.b16 %v333
    %v962 = vunpack.c.h.b16 %v333
    %v963 = vunpack.c.l.b16 %v334
    %v964 = vunpack.c.l.b16 %v335
    %v965 = vunpack.c.h.b16 %v335
    %v966 = vunpack.c.l.b16 %v336
    %v967 = vunpack.c.h.b16 %v336
    %v968 = vunpack.c.l.b16 %v337
    %v969 = vunpack.c.l.b16 %v338
    %v970 = vunpack.c.h.b16 %v338
    %v971 = vunpack.c.l.b16 %v339
    %v972 = vunpack.c.h.b16 %v339
    %v973 = vunpack.c.l.b16 %v340
    %v974 = vunpack.c.l.b16 %v341
    %v975 = vunpack.c.h.b16 %v341
    %v976 = vunpack.c.l.b16 %v342
    %v977 = vunpack.c.h.b16 %v342
    %v978 = vunpack.c.l.b16 %v343
    %v979 = vunpack.c.l.b16 %v344
    %v980 = vunpack.c.h.b16 %v344
    %v981 = vunpack.c.l.b16 %v345
    %v982 = vunpack.c.h.b16 %v345
    %v983 = vunpack.c.l.b16 %v346
    %v984 = vunpack.c.l.b16 %v347
    %v985 = vunpack.c.h.b16 %v347
    %v986 = vunpack.c.l.b16 %v348
    %v987 = vunpack.c.h.b16 %v348
    %v988 = vunpack.c.l.b16 %v349
    %v989 = vunpack.c.l.b16 %v350
    %v990 = vunpack.c.h.b16 %v350
    %v991 = vunpack.c.l.b16 %v351
    %v992 = vunpack.c.h.b16 %v351
    %v993 = vunpack.c.l.b16 %v352
    %v994 = vunpack.c.l.b16 %v353
    %v995 = vunpack.c.h.b16 %v353
    %v996 = vunpack.c.l.b16 %v354
    %v997 = vunpack.c.h.b16 %v354
    %v998 = vunpack.c.l.b16 %v355
    %v999 = vunpack.c.l.b16 %v356
    %v1000 = vunpack.c.h.b16 %v356
    %v1001 = vunpack.c.l.b16 %v357
    %v1002 = vunpack.c.h.b16 %v357
    %v1003 = vunpack.c.l.b16 %v358
    %v1004 = vunpack.c.l.b16 %v359
    %v1005 = vunpack.c.h.b16 %v359
    %v1006 = vunpack.c.l.b16 %v360
    %v1007 = vunpack.c.h.b16 %v360
    %v1008 = vunpack.c.l.b16 %v361
    %v1009 = vunpack.c.l.b16 %v362
    %v1010 = vunpack.c.h.b16 %v362
    %v1011 = vunpack.c.l.b16 %v363
    %v1012 = vunpack.c.h.b16 %v363
    %v1013 = vunpack.c.l.b16 %v364
    %v1014 = vunpack.c.l.b16 %v365
    %v1015 = vunpack.c.h.b16 %v365
    %v1016 = vunpack.c.l.b16 %v366
    %v1017 = vunpack.c.h.b16 %v366
    %v1018 = vunpack.c.l.b16 %v367
    %v1019 = vunpack.c.l.b16 %v368
    %v1020 = vunpack.c.h.b16 %v368
    %v1021 = vunpack.c.l.b16 %v369
    %v1022 = vunpack.c.h.b16 %v369
    %v1023 = vunpack.c.l.b16 %v370
    %v1024 = vunpack.c.l.b16 %v371
    %v1025 = vunpack.c.h.b16 %v371
    %v1026 = vunpack.c.l.b16 %v372
    %v1027 = vunpack.c.h.b16 %v372
    %v1028 = vunpack.c.l.b16 %v373
    %v1029 = vunpack.c.l.b16 %v374
    %v1030 = vunpack.c.h.b16 %v374
    %v1031 = vunpack.c.l.b16 %v375
    %v1032 = vunpack.c.h.b16 %v375
    %v1033 = vunpack.c.l.b16 %v376
    %v1034 = vunpack.c.l.b16 %v377
    %v1035 = vunpack.c.h.b16 %v377
    %v1036 = vunpack.c.l.b16 %v378
    %v1037 = vunpack.c.h.b16 %v378
    %v1038 = vunpack.c.l.b16 %v379
    %v1039 = vunpack.c.l.b16 %v380
    %v1040 = vunpack.c.h.b16 %v380
    %v1041 = vunpack.c.l.b16 %v381
    %v1042 = vunpack.c.h.b16 %v381
    %v1043 = vunpack.c.l.b16 %v382
    %v1044 = vunpack.c.l.b16 %v383
    %v1045 = vunpack.c.h.b16 %v383
    %v1046 = vunpack.c.l.b16 %v384
    %v1047 = vunpack.c.h.b16 %v384
    %v1048 = vunpack.c.l.b16 %v385
    %v1049 = vunpack.c.l.b16 %v386
    %v1050 = vunpack.c.h.b16 %v386
    %v1051 = vunpack.c.l.b16 %v387
    %v1052 = vunpack.c.h.b16 %v387
    %v1053 = vunpack.c.l.b16 %v388
    %v1054 = vunpack.c.l.b16 %v389
    %v1055 = vunpack.c.h.b16 %v389
    %v1056 = vunpack.c.l.b16 %v390
    %v1057 = vunpack.c.h.b16 %v390
    %v1058 = vunpack.c.l.b16 %v391
    %v1059 = vunpack.c.l.b16 %v392
    %v1060 = vunpack.c.h.b16 %v392
    %v1061 = vunpack.c.l.b16 %v393
    %v1062 = vunpack.c.h.b16 %v393
    %v1063 = vunpack.c.l.b16 %v394
    %v1064 = vunpack.c.l.b16 %v395
    %v1065 = vunpack.c.h.b16 %v395
    %v1066 = vunpack.c.l.b16 %v396
    %v1067 = vunpack.c.h.b16 %v396
    %v1068 = vunpack.c.l.b16 %v397
    %v1069 = vunpack.c.l.b16 %v398
    %v1070 = vunpack.c.h.b16 %v398
    %v1071 = vunpack.c.l.b16 %v399
    %v1072 = vunpack.c.h.b16 %v399
    %v1073 = vunpack.c.l.b16 %v400
    %v1074 = vunpack.c.l.b16 %v401
    %v1075 = vunpack.c.h.b16 %v401
    %v1076 = vunpack.c.l.b16 %v402
    %v1077 = vunpack.c.h.b16 %v402
    %v1078 = vunpack.c.l.b16 %v403
    %v1079 = vunpack.c.l.b16 %v404
    %v1080 = vunpack.c.h.b16 %v404
    %v1081 = vunpack.c.l.b16 %v405
    %v1082 = vunpack.c.h.b16 %v405
    %v1083 = vunpack.c.l.b16 %v406
    %v1084 = vunpack.c.l.b16 %v407
    %v1085 = vunpack.c.h.b16 %v407
    %v1086 = vunpack.c.l.b16 %v408
    %v1087 = vunpack.c.h.b16 %v408
    %v1088 = vunpack.c.l.b16 %v409
    %v1089 = vunpack.c.l.b16 %v410
    %v1090 = vunpack.c.h.b16 %v410
    %v1091 = vunpack.c.l.b16 %v411
    %v1092 = vunpack.c.h.b16 %v411
    %v1093 = vunpack.c.l.b16 %v412
    %v1094 = vunpack.c.l.b16 %v413
    %v1095 = vunpack.c.h.b16 %v413
    %v1096 = vunpack.c.l.b16 %v414
    %v1097 = vunpack.c.h.b16 %v414
    %v1098 = vunpack.c.l.b16 %v415
    %v1099 = vunpack.c.l.b16 %v416
    %v1100 = vunpack.c.h.b16 %v416
    %v1101 = vunpack.c.l.b16 %v417
    %v1102 = vunpack.c.h.b16 %v417
    %v1103 = vunpack.c.l.b16 %v418
    %v1104 = vunpack.c.l.b16 %v419
    %v1105 = vunpack.c.h.b16 %v419
    %v1106 = vunpack.c.l.b16 %v420
    %v1107 = vunpack.c.h.b16 %v420
    %v1108 = vunpack.c.l.b16 %v421
    %v1109 = vunpack.c.l.b16 %v422
    %v1110 = vunpack.c.h.b16 %v422
    %v1111 = vunpack.c.l.b16 %v423
    %v1112 = vunpack.c.h.b16 %v423
    %v1113 = vunpack.c.l.b16 %v424
    %v1114 = vunpack.c.l.b16 %v425
    %v1115 = vunpack.c.h.b16 %v425
    %v1116 = vunpack.c.l.b16 %v426
    %v1117 = vunpack.c.h.b16 %v426
    %v1118 = vunpack.c.l.b16 %v427
    %v1119 = vunpack.c.l.b16 %v428
    %v1120 = vunpack.c.h.b16 %v428
    %v1121 = vunpack.c.l.b16 %v429
    %v1122 = vunpack.c.h.b16 %v429
    %v1123 = vunpack.c.l.b16 %v430
    %v1124 = vunpack.c.l.b16 %v431
    %v1125 = vunpack.c.h.b16 %v431
    %v1126 = vunpack.c.l.b16 %v432
    %v1127 = vunpack.c.h.b16 %v432
    %v1128 = vunpack.c.l.b16 %v433
    %v1129 = vunpack.c.l.b16 %v434
    %v1130 = vunpack.c.h.b16 %v434
    %v1131 = vunpack.c.l.b16 %v435
    %v1132 = vunpack.c.h.b16 %v435
    %v1133 = vunpack.c.l.b16 %v436
    %v1134 = vunpack.c.l.b16 %v437
    %v1135 = vunpack.c.h.b16 %v437
    %v1136 = vunpack.c.l.b16 %v438
    %v1137 = vunpack.c.h.b16 %v438
    %v1138 = vunpack.c.l.b16 %v439
    %v1139 = vunpack.c.l.b16 %v440
    %v1140 = vunpack.c.h.b16 %v440
    %v1141 = vunpack.c.l.b16 %v441
    %v1142 = vunpack.c.h.b16 %v441
    %v1143 = vunpack.c.l.b16 %v442
    %v1144 = vunpack.c.l.b16 %v443
    %v1145 = vunpack.c.h.b16 %v443
    %v1146 = vunpack.c.l.b16 %v444
    %v1147 = vunpack.c.h.b16 %v444
    %v1148 = vunpack.c.l.b16 %v445
    %v1149 = vunpack.c.l.b16 %v446
    %v1150 = vunpack.c.h.b16 %v446
    %v1151 = vunpack.c.l.b16 %v447
    %v1152 = vunpack.c.h.b16 %v447
    %v1153 = vunpack.c.l.b16 %v448
    %v1154 = vunpack.c.l.b16 %v449
    %v1155 = vunpack.c.h.b16 %v449
    %v1156 = vunpack.c.l.b16 %v450
    %v1157 = vunpack.c.h.b16 %v450
    %v1158 = vunpack.c.l.b16 %v451
    %v1159 = vunpack.c.l.b16 %v452
    %v1160 = vunpack.c.h.b16 %v452
    %v1161 = vunpack.c.l.b16 %v453
    %v1162 = vunpack.c.h.b16 %v453
    %v1163 = vunpack.c.l.b16 %v454
    %v1164 = vunpack.c.l.b16 %v455
    %v1165 = vunpack.c.h.b16 %v455
    %v1166 = vunpack.c.l.b16 %v456
    %v1167 = vunpack.c.h.b16 %v456
    %v1168 = vunpack.c.l.b16 %v457
    %v1169 = vunpack.c.l.b16 %v458
    %v1170 = vunpack.c.h.b16 %v458
    %v1171 = vunpack.c.l.b16 %v459
    %v1172 = vunpack.c.h.b16 %v459
    %v1173 = vunpack.c.l.b16 %v460
    %v1174 = vunpack.c.l.b16 %v461
    %v1175 = vunpack.c.h.b16 %v461
    %v1176 = vunpack.c.l.b16 %v462
    %v1177 = vunpack.c.h.b16 %v462
    %v1178 = vunpack.c.l.b16 %v463
    %v1179 = vunpack.c.l.b16 %v464
    %v1180 = vunpack.c.h.b16 %v464
    %v1181 = vunpack.c.l.b16 %v465
    %v1182 = vunpack.c.h.b16 %v465
    %v1183 = vunpack.c.l.b16 %v466
    %v1184 = vunpack.c.l.b16 %v467
    %v1185 = vunpack.c.h.b16 %v467
    %v1186 = vunpack.c.l.b16 %v468
    %v1187 = vunpack.c.h.b16 %v468
    %v1188 = vunpack.c.l.b16 %v469
    %v1189 = vunpack.c.l.b16 %v470
    %v1190 = vunpack.c.h.b16 %v470
    %v1191 = vunpack.c.l.b16 %v471
    %v1192 = vunpack.c.h.b16 %v471
    %v1193 = vunpack.c.l.b16 %v472
    %v1194 = vunpack.c.l.b16 %v473
    %v1195 = vunpack.c.h.b16 %v473
    %v1196 = vunpack.c.l.b16 %v474
    %v1197 = vunpack.c.h.b16 %v474
    %v1198 = vunpack.c.l.b16 %v475
    %v1199 = vunpack.c.l.b16 %v476
    %v1200 = vunpack.c.h.b16 %v476
    %v1201 = vunpack.c.l.b16 %v477
    %v1202 = vunpack.c.h.b16 %v477
    %v1203 = vunpack.c.l.b16 %v478
    %v1204 = vunpack.c.l.b16 %v479
    %v1205 = vunpack.c.h.b16 %v479
    %v1206 = vunpack.c.l.b16 %v480
    %v1207 = vunpack.c.h.b16 %v480
    %v1208 = vunpack.c.l.b16 %v481
    %v1209 = vunpack.c.l.b16 %v482
    %v1210 = vunpack.c.h.b16 %v482
    %v1211 = vunpack.c.l.b16 %v483
    %v1212 = vunpack.c.h.b16 %v483
    %v1213 = vunpack.c.l.b16 %v484
    %v1214 = vunpack.c.l.b16 %v485
    %v1215 = vunpack.c.h.b16 %v485
    %v1216 = vunpack.c.l.b16 %v486
    %v1217 = vunpack.c.h.b16 %v486
    %v1218 = vunpack.c.l.b16 %v487
    %v1219 = vunpack.c.l.b16 %v488
    %v1220 = vunpack.c.h.b16 %v488
    %v1221 = vunpack.c.l.b16 %v489
    %v1222 = vunpack.c.h.b16 %v489
    %v1223 = vunpack.c.l.b16 %v490
    %v1224 = vunpack.c.l.b16 %v491
    %v1225 = vunpack.c.h.b16 %v491
    %v1226 = vunpack.c.l.b16 %v492
    %v1227 = vunpack.c.h.b16 %v492
    %v1228 = vunpack.c.l.b16 %v493
    %v1229 = vunpack.c.l.b16 %v494
    %v1230 = vunpack.c.h.b16 %v494
    %v1231 = vunpack.c.l.b16 %v495
    %v1232 = vunpack.c.h.b16 %v495
    %v1233 = vunpack.c.l.b16 %v496
    %v1234 = vunpack.c.l.b16 %v497
    %v1235 = vunpack.c.h.b16 %v497
    %v1236 = vunpack.c.l.b16 %v498
    %v1237 = vunpack.c.h.b16 %v498
    %v1238 = vunpack.c.l.b16 %v499
    %v1239 = vunpack.c.l.b16 %v500
    %v1240 = vunpack.c.h.b16 %v500
    %v1241 = vunpack.c.l.b16 %v501
    %v1242 = vunpack.c.h.b16 %v501
    %v1243 = vunpack.c.l.b16 %v502
    %v1244 = vunpack.c.l.b16 %v503
    %v1245 = vunpack.c.h.b16 %v503
    %v1246 = vunpack.c.l.b16 %v504
    %v1247 = vunpack.c.h.b16 %v504
    %v1248 = vunpack.c.l.b16 %v505
    %v1249 = vunpack.c.l.b16 %v506
    %v1250 = vunpack.c.h.b16 %v506
    %v1251 = vunpack.c.l.b16 %v507
    %v1252 = vunpack.c.h.b16 %v507
    %v1253 = vunpack.c.l.b16 %v508
    %v1254 = vunpack.c.l.b16 %v509
    %v1255 = vunpack.c.h.b16 %v509
    %v1256 = vunpack.c.l.b16 %v510
    %v1257 = vunpack.c.h.b16 %v510
    %v1258 = vunpack.c.l.b16 %v511
    %v1259 = vunpack.c.l.b16 %v512
    %v1260 = vunpack.c.h.b16 %v512
    %v1261 = vunpack.c.l.b16 %v513
    %v1262 = vunpack.c.h.b16 %v513
    %v1263 = vunpack.c.l.b16 %v514
    %v1264 = vunpack.c.l.b16 %v515
    %v1265 = vunpack.c.h.b16 %v515
    %v1266 = vunpack.c.l.b16 %v516
    %v1267 = vunpack.c.h.b16 %v516
    %v1268 = vunpack.c.l.b16 %v517
    %v1269 = vunpack.c.l.b16 %v518
    %v1270 = vunpack.c.h.b16 %v518
    %v1271 = vunpack.c.l.b16 %v519
    %v1272 = vunpack.c.h.b16 %v519
    %v1273 = vunpack.c.l.b16 %v520
    %v1274 = vunpack.c.l.b16 %v521
    %v1275 = vunpack.c.h.b16 %v521
    %v1276 = vunpack.c.l.b16 %v522
    %v1277 = vunpack.c.h.b16 %v522
    %v1278 = vunpack.c.l.b16 %v523
    %v1279 = vunpack.c.l.b16 %v524
    %v1280 = vunpack.c.h.b16 %v524
    %v1281 = vunpack.c.l.b16 %v525
    %v1282 = vunpack.c.h.b16 %v525
    %v1283 = vunpack.c.l.b16 %v526
    %v1284 = vunpack.c.l.b16 %v527
    %v1285 = vunpack.c.h.b16 %v527
    %v1286 = vunpack.c.l.b16 %v528
    %v1287 = vunpack.c.h.b16 %v528
    %v1288 = vunpack.c.l.b16 %v529
    %v1289 = vunpack.c.l.b16 %v530
    %v1290 = vunpack.c.h.b16 %v530
    %v1291 = vunpack.c.l.b16 %v531
    %v1292 = vunpack.c.h.b16 %v531
    %v1293 = vunpack.c.l.b16 %v532
    %v1294 = vunpack.c.l.b16 %v533
    %v1295 = vunpack.c.h.b16 %v533
    %v1296 = vunpack.c.l.b16 %v534
    %v1297 = vunpack.c.h.b16 %v534
    %v1298 = vunpack.c.l.b16 %v535
    %v1299 = vunpack.c.l.b16 %v536
    %v1300 = vunpack.c.h.b16 %v536
    %v1301 = vunpack.c.l.b16 %v537
    %v1302 = vunpack.c.h.b16 %v537
    %v1303 = vunpack.c.l.b16 %v538
    %v1304 = vunpack.c.l.b16 %v539
    %v1305 = vunpack.c.h.b16 %v539
    %v1306 = vunpack.c.l.b16 %v540
    %v1307 = vunpack.c.h.b16 %v540
    %v1308 = vunpack.c.l.b16 %v541
    %v1309 = vunpack.c.l.b16 %v542
    %v1310 = vunpack.c.h.b16 %v542
    %v1311 = vunpack.c.l.b16 %v543
    %v1312 = vunpack.c.h.b16 %v543
    %v1313 = vunpack.c.l.b16 %v544
    %v1314 = vunpack.c.l.b16 %v545
    %v1315 = vunpack.c.h.b16 %v545
    %v1316 = vunpack.c.l.b16 %v546
    %v1317 = vunpack.c.h.b16 %v546
    %v1318 = vunpack.c.l.b16 %v547
    %v1319 = vunpack.c.l.b16 %v548
    %v1320 = vunpack.c.h.b16 %v548
    %v1321 = vunpack.c.l.b16 %v549
    %v1322 = vunpack.c.h.b16 %v549
    %v1323 = vunpack.c.l.b16 %v550
    %v1324 = vunpack.c.l.b16 %v551
    %v1325 = vunpack.c.h.b16 %v551
    %v1326 = vunpack.c.l.b16 %v552
    %v1327 = vunpack.c.h.b16 %v552
    %v1328 = vunpack.c.l.b16 %v553
    %v1329 = vunpack.c.l.b16 %v554
    %v1330 = vunpack.c.h.b16 %v554
    %v1331 = vunpack.c.l.b16 %v555
    %v1332 = vunpack.c.h.b16 %v555
    %v1333 = vunpack.c.l.b16 %v556
    %v1334 = vunpack.c.l.b16 %v557
    %v1335 = vunpack.c.h.b16 %v557
    %v1336 = vunpack.c.l.b16 %v558
    %v1337 = vunpack.c.h.b16 %v558
    %v1338 = vunpack.c.l.b16 %v559
    %v1339 = vunpack.c.l.b16 %v560
    %v1340 = vunpack.c.h.b16 %v560
    %v1341 = vunpack.c.l.b16 %v561
    %v1342 = vunpack.c.h.b16 %v561
    %v1343 = vunpack.c.l.b16 %v562
    %v1344 = vunpack.c.l.b16 %v563
    %v1345 = vunpack.c.h.b16 %v563
    %v1346 = vunpack.c.l.b16 %v564
    %v1347 = vunpack.c.h.b16 %v564
    %v1348 = vunpack.c.l.b16 %v565
    %v1349 = vunpack.c.l.b16 %v566
    %v1350 = vunpack.c.h.b16 %v566
    %v1351 = vunpack.c.l.b16 %v567
    %v1352 = vunpack.c.h.b16 %v567
    %v1353 = vunpack.c.l.b16 %v568
    %v1354 = vunpack.c.l.b16 %v569
    %v1355 = vunpack.c.h.b16 %v569
    %v1356 = vunpack.c.l.b16 %v570
    %v1357 = vunpack.c.h.b16 %v570
    %v1358 = vunpack.c.l.b16 %v571
    %v1359 = vunpack.c.l.b16 %v572
    %v1360 = vunpack.c.h.b16 %v572
    %v1361 = vunpack.c.l.b16 %v573
    %v1362 = vunpack.c.h.b16 %v573
    %v1363 = vunpack.c.l.b16 %v574
    %v1364 = vunpack.c.l.b16 %v575
    %v1365 = vunpack.c.h.b16 %v575
    %v1366 = vunpack.c.l.b16 %v576
    %v1367 = vunpack.c.h.b16 %v576
    %v1368 = vunpack.c.l.b16 %v577
    %v1369 = vunpack.c.l.b16 %v578
    %v1370 = vunpack.c.h.b16 %v578
    %v1371 = vunpack.c.l.b16 %v579
    %v1372 = vunpack.c.h.b16 %v579
    %v1373 = vunpack.c.l.b16 %v580
    %v1374 = vunpack.c.l.b16 %v581
    %v1375 = vunpack.c.h.b16 %v581
    %v1376 = vunpack.c.l.b16 %v582
    %v1377 = vunpack.c.h.b16 %v582
    %v1378 = vunpack.c.l.b16 %v583
    %v1379 = vunpack.c.l.b16 %v584
    %v1380 = vunpack.c.h.b16 %v584
    %v1381 = vunpack.c.l.b16 %v585
    %v1382 = vunpack.c.h.b16 %v585
    %v1383 = vunpack.c.l.b16 %v586
    %v1384 = vunpack.c.l.b16 %v587
    %v1385 = vunpack.c.h.b16 %v587
    %v1386 = vunpack.c.l.b16 %v588
    %v1387 = vunpack.c.h.b16 %v588
    %v1388 = vunpack.c.l.b16 %v589
    %v1389 = vunpack.c.l.b16 %v590
    %v1390 = vunpack.c.h.b16 %v590
    %v1391 = vunpack.c.l.b16 %v591
    %v1392 = vunpack.c.h.b16 %v591
    %v1393 = vunpack.c.l.b16 %v592
    %v1394 = vunpack.c.l.b16 %v593
    %v1395 = vunpack.c.h.b16 %v593
    %v1396 = vunpack.c.l.b16 %v594
    %v1397 = vunpack.c.h.b16 %v594
    %v1398 = vunpack.c.l.b16 %v595
    %v1399 = vunpack.c.l.b16 %v596
    %v1400 = vunpack.c.h.b16 %v596
    %v1401 = vunpack.c.l.b16 %v597
    %v1402 = vunpack.c.h.b16 %v597
    %v1403 = vunpack.c.l.b16 %v598
    %v1404 = vunpack.c.l.b16 %v599
    %v1405 = vunpack.c.h.b16 %v599
    %v1406 = vunpack.c.l.b16 %v600
    %v1407 = vunpack.c.h.b16 %v600
    %v1408 = vunpack.c.l.b16 %v601
    %v1409 = vunpack.c.l.b16 %v602
    %v1410 = vunpack.c.h.b16 %v602
    %v1411 = vunpack.c.l.b16 %v603
    %v1412 = vunpack.c.h.b16 %v603
    %v1413 = vunpack.c.l.b16 %v604
    %v1414 = vunpack.c.l.b16 %v605
    %v1415 = vunpack.c.h.b16 %v605
    %v1416 = vunpack.c.l.b16 %v606
    %v1417 = vunpack.c.h.b16 %v606
    %v1418 = vunpack.c.l.b16 %v607
    %v1419 = vunpack.c.l.b16 %v608
    %v1420 = vunpack.c.h.b16 %v608
    %v1421 = vunpack.c.l.b16 %v609
    %v1422 = vunpack.c.h.b16 %v609
    %v1423 = vunpack.c.l.b16 %v610
    %v1424 = vunpack.c.l.b16 %v611
    %v1425 = vunpack.c.h.b16 %v611
    %v1426 = vunpack.c.l.b16 %v612
    %v1427 = vunpack.c.h.b16 %v612
    %v1428 = vunpack.c.l.b16 %v613
    %v1429 = vunpack.c.l.b16 %v614
    %v1430 = vunpack.c.h.b16 %v614
    %v1431 = vunpack.c.l.b16 %v615
    %v1432 = vunpack.c.h.b16 %v615
    %v1433 = vunpack.c.l.b16 %v616
    %v1434 = vunpack.c.l.b16 %v617
    %v1435 = vunpack.c.h.b16 %v617
    %v1436 = vunpack.c.l.b16 %v618
    %v1437 = vunpack.c.h.b16 %v618
    %v1438 = vunpack.c.l.b16 %v619
    %v1439 = vunpack.c.l.b16 %v620
    %v1440 = vunpack.c.h.b16 %v620
    %v1441 = vunpack.c.l.b16 %v621
    %v1442 = vunpack.c.h.b16 %v621
    %v1443 = vunpack.c.l.b16 %v622
    %v1444 = vunpack.c.l.b16 %v623
    %v1445 = vunpack.c.h.b16 %v623
    %v1446 = vunpack.c.l.b16 %v624
    %v1447 = vunpack.c.h.b16 %v624
    %v1448 = vunpack.c.l.b16 %v625
    %v1449 = vunpack.c.l.b16 %v626
    %v1450 = vunpack.c.h.b16 %v626
    %v1451 = vunpack.c.l.b16 %v627
    %v1452 = vunpack.c.h.b16 %v627
    %v1453 = vunpack.c.l.b16 %v628
    %v1454 = vunpack.c.l.b16 %v629
    %v1455 = vunpack.c.h.b16 %v629
    %v1456 = vunpack.c.l.b16 %v630
    %v1457 = vunpack.c.h.b16 %v630
    %v1458 = vunpack.c.l.b16 %v631
    %v1459 = vpack.c.b16 %v964, %v959
    %v1460 = vpack.c.b16 %v965, %v960
    %v1461 = vpack.c.b16 %v966, %v961
    %v1462 = vpack.c.b16 %v967, %v962
    %v1463 = vpack.c.b16 %v968, %v963
    %v1464 = vpack.c.b16 %v974, %v969
    %v1465 = vpack.c.b16 %v975, %v970
    %v1466 = vpack.c.b16 %v976, %v971
    %v1467 = vpack.c.b16 %v977, %v972
    %v1468 = vpack.c.b16 %v978, %v973
    %v1469 = vpack.c.b16 %v984, %v979
    %v1470 = vpack.c.b16 %v985, %v980
    %v1471 = vpack.c.b16 %v986, %v981
    %v1472 = vpack.c.b16 %v987, %v982
    %v1473 = vpack.c.b16 %v988, %v983
    %v1474 = vpack.c.b16 %v994, %v989
    %v1475 = vpack.c.b16 %v995, %v990
    %v1476 = vpack.c.b16 %v996, %v991
    %v1477 = vpack.c.b16 %v997, %v992
    %v1478 = vpack.c.b16 %v998, %v993
    %v1479 = vpack.c.b16 %v1004, %v999
    %v1480 = vpack.c.b16 %v1005, %v1000
    %v1481 = vpack.c.b16 %v1006, %v1001
    %v1482 = vpack.c.b16 %v1007, %v1002
    %v1483 = vpack.c.b16 %v1008, %v1003
    %v1484 = vpack.c.b16 %v1014, %v1009
    %v1485 = vpack.c.b16 %v1015, %v1010
    %v1486 = vpack.c.b16 %v1016, %v1011
    %v1487 = vpack.c.b16 %v1017, %v1012
    %v1488 = vpack.c.b16 %v1018, %v1013
    %v1489 = vpack.c.b16 %v1024, %v1019
    %v1490 = vpack.c.b16 %v1025, %v1020
    %v1491 = vpack.c.b16 %v1026, %v1021
    %v1492 = vpack.c.b16 %v1027, %v1022
    %v1493 = vpack.c.b16 %v1028, %v1023
    %v1494 = vpack.c.b16 %v1034, %v1029
    %v1495 = vpack.c.b16 %v1035, %v1030
    %v1496 = vpack.c.b16 %v1036, %v1031
    %v1497 = vpack.c.b16 %v1037, %v1032
    %v1498 = vpack.c.b16 %v1038, %v1033
    %v1499 = vpack.c.b16 %v1044, %v1039
    %v1500 = vpack.c.b16 %v1045, %v1040
    %v1501 = vpack.c.b16 %v1046, %v1041
    %v1502 = vpack.c.b16 %v1047, %v1042
    %v1503 = vpack.c.b16 %v1048, %v1043
    %v1504 = vpack.c.b16 %v1054, %v1049
    %v1505 = vpack.c.b16 %v1055, %v1050
    %v1506 = vpack.c.b16 %v1056, %v1051
    %v1507 = vpack.c.b16 %v1057, %v1052
    %v1508 = vpack.c.b16 %v1058, %v1053
    %v1509 = vpack.c.b16 %v1064, %v1059
    %v1510 = vpack.c.b16 %v1065, %v1060
    %v1511 = vpack.c.b16 %v1066, %v1061
    %v1512 = vpack.c.b16 %v1067, %v1062
    %v1513 = vpack.c.b16 %v1068, %v1063
    %v1514 = vpack.c.b16 %v1074, %v1069
    %v1515 = vpack.c.b16 %v1075, %v1070
    %v1516 = vpack.c.b16 %v1076, %v1071
    %v1517 = vpack.c.b16 %v1077, %v1072
    %v1518 = vpack.c.b16 %v1078, %v1073
    %v1519 = vpack.c.b16 %v1084, %v1079
    %v1520 = vpack.c.b16 %v1085, %v1080
    %v1521 = vpack.c.b16 %v1086, %v1081
    %v1522 = vpack.c.b16 %v1087, %v1082
    %v1523 = vpack.c.b16 %v1088, %v1083
    %v1524 = vpack.c.b16 %v1094, %v1089
    %v1525 = vpack.c.b16 %v1095, %v1090
    %v1526 = vpack.c.b16 %v1096, %v1091
    %v1527 = vpack.c.b16 %v1097, %v1092
    %v1528 = vpack.c.b16 %v1098, %v1093
    %v1529 = vpack.c.b16 %v1104, %v1099
    %v1530 = vpack.c.b16 %v1105, %v1100
    %v1531 = vpack.c.b16 %v1106, %v1101
    %v1532 = vpack.c.b16 %v1107, %v1102
    %v1533 = vpack.c.b16 %v1108, %v1103
    %v1534 = vpack.c.b16 %v1114, %v1109
    %v1535 = vpack.c.b16 %v1115, %v1110
    %v1536 = vpack.c.b16 %v1116, %v1111
    %v1537 = vpack.c.b16 %v1117, %v1112
    %v1538 = vpack.c.b16 %v1118, %v1113
    %v1539 = vpack.c.b16 %v1124, %v1119
    %v1540 = vpack.c.b16 %v1125, %v1120
    %v1541 = vpack.c.b16 %v1126, %v1121
    %v1542 = vpack.c.b16 %v1127, %v1122
    %v1543 = vpack.c.b16 %v1128, %v1123
    %v1544 = vpack.c.b16 %v1134, %v1129
    %v1545 = vpack.c.b16 %v1135, %v1130
    %v1546 = vpack.c.b16 %v1136, %v1131
    %v1547 = vpack.c.b16 %v1137, %v1132
    %v1548 = vpack.c.b16 %v1138, %v1133
    %v1549 = vpack.c.b16 %v1144, %v1139
    %v1550 = vpack.c.b16 %v1145, %v1140
    %v1551 = vpack.c.b16 %v1146, %v1141
    %v1552 = vpack.c.b16 %v1147, %v1142
    %v1553 = vpack.c.b16 %v1148, %v1143
    %v1554 = vpack.c.b16 %v1154, %v1149
    %v1555 = vpack.c.b16 %v1155, %v1150
    %v1556 = vpack.c.b16 %v1156, %v1151
    %v1557 = vpack.c.b16 %v1157, %v1152
    %v1558 = vpack.c.b16 %v1158, %v1153
    %v1559 = vpack.c.b16 %v1164, %v1159
    %v1560 = vpack.c.b16 %v1165, %v1160
    %v1561 = vpack.c.b16 %v1166, %v1161
    %v1562 = vpack.c.b16 %v1167, %v1162
    %v1563 = vpack.c.b16 %v1168, %v1163
    %v1564 = vpack.c.b16 %v1174, %v1169
    %v1565 = vpack.c.b16 %v1175, %v1170
    %v1566 = vpack.c.b16 %v1176, %v1171
    %v1567 = vpack.c.b16 %v1177, %v1172
    %v1568 = vpack.c.b16 %v1178, %v1173
    %v1569 = vpack.c.b16 %v1184, %v1179
    %v1570 = vpack.c.b16 %v1185, %v1180
    %v1571 = vpack.c.b16 %v1186, %v1181
    %v1572 = vpack.c.b16 %v1187, %v1182
    %v1573 = vpack.c.b16 %v1188, %v1183
    %v1574 = vpack.c.b16 %v1194, %v1189
    %v1575 = vpack.c.b16 %v1195, %v1190
    %v1576 = vpack.c.b16 %v1196, %v1191
    %v1577 = vpack.c.b16 %v1197, %v1192
    %v1578 = vpack.c.b16 %v1198, %v1193
    %v1579 = vpack.c.b16 %v1204, %v1199
    %v1580 = vpack.c.b16 %v1205, %v1200
    %v1581 = vpack.c.b16 %v1206, %v1201
    %v1582 = vpack.c.b16 %v1207, %v1202
    %v1583 = vpack.c.b16 %v1208, %v1203
    %v1584 = vpack.c.b16 %v1214, %v1209
    %v1585 = vpack.c.b16 %v1215, %v1210
    %v1586 = vpack.c.b16 %v1216, %v1211
    %v1587 = vpack.c.b16 %v1217, %v1212
    %v1588 = vpack.c.b16 %v1218, %v1213
    %v1589 = vpack.c.b16 %v1224, %v1219
    %v1590 = vpack.c.b16 %v1225, %v1220
    %v1591 = vpack.c.b16 %v1226, %v1221
    %v1592 = vpack.c.b16 %v1227, %v1222
    %v1593 = vpack.c.b16 %v1228, %v1223
    %v1594 = vpack.c.b16 %v1234, %v1229
    %v1595 = vpack.c.b16 %v1235, %v1230
    %v1596 = vpack.c.b16 %v1236, %v1231
    %v1597 = vpack.c.b16 %v1237, %v1232
    %v1598 = vpack.c.b16 %v1238, %v1233
    %v1599 = vpack.c.b16 %v1244, %v1239
    %v1600 = vpack.c.b16 %v1245, %v1240
    %v1601 = vpack.c.b16 %v1246, %v1241
    %v1602 = vpack.c.b16 %v1247, %v1242
    %v1603 = vpack.c.b16 %v1248, %v1243
    %v1604 = vpack.c.b16 %v1254, %v1249
    %v1605 = vpack.c.b16 %v1255, %v1250
    %v1606 = vpack.c.b16 %v1256, %v1251
    %v1607 = vpack.c.b16 %v1257, %v1252
    %v1608 = vpack.c.b16 %v1258, %v1253
    %v1609 = vpack.c.b16 %v1264, %v1259
    %v1610 = vpack.c.b16 %v1265, %v1260
    %v1611 = vpack.c.b16 %v1266, %v1261
    %v1612 = vpack.c.b16 %v1267, %v1262
    %v1613 = vpack.c.b16 %v1268, %v1263
    %v1614 = vpack.c.b16 %v1274, %v1269
    %v1615 = vpack.c.b16 %v1275, %v1270
    %v1616 = vpack.c.b16 %v1276, %v1271
    %v1617 = vpack.c.b16 %v1277, %v1272
    %v1618 = vpack.c.b16 %v1278, %v1273
    %v1619 = vpack.c.b16 %v1284, %v1279
    %v1620 = vpack.c.b16 %v1285, %v1280
    %v1621 = vpack.c.b16 %v1286, %v1281
    %v1622 = vpack.c.b16 %v1287, %v1282
    %v1623 = vpack.c.b16 %v1288, %v1283
    %v1624 = vpack.c.b16 %v1294, %v1289
    %v1625 = vpack.c.b16 %v1295, %v1290
    %v1626 = vpack.c.b16 %v1296, %v1291
    %v1627 = vpack.c.b16 %v1297, %v1292
    %v1628 = vpack.c.b16 %v1298, %v1293
    %v1629 = vpack.c.b16 %v1304, %v1299
    %v1630 = vpack.c.b16 %v1305, %v1300
    %v1631 = vpack.c.b16 %v1306, %v1301
    %v1632 = vpack.c.b16 %v1307, %v1302
    %v1633 = vpack.c.b16 %v1308, %v1303
    %v1634 = vpack.c.b16 %v1314, %v1309
    %v1635 = vpack.c.b16 %v1315, %v1310
    %v1636 = vpack.c.b16 %v1316, %v1311
    %v1637 = vpack.c.b16 %v1317, %v1312
    %v1638 = vpack.c.b16 %v1318, %v1313
    %v1639 = vpack.c.b16 %v1324, %v1319
    %v1640 = vpack.c.b16 %v1325, %v1320
    %v1641 = vpack.c.b16 %v1326, %v1321
    %v1642 = vpack.c.b16 %v1327, %v1322
    %v1643 = vpack.c.b16 %v1328, %v1323
    %v1644 = vpack.c.b16 %v1334, %v1329
    %v1645 = vpack.c.b16 %v1335, %v1330
    %v1646 = vpack.c.b16 %v1336, %v1331
    %v1647 = vpack.c.b16 %v1337, %v1332
    %v1648 = vpack.c.b16 %v1338, %v1333
    %v1649 = vpack.c.b16 %v1344, %v1339
    %v1650 = vpack.c.b16 %v1345, %v1340
    %v1651 = vpack.c.b16 %v1346, %v1341
    %v1652 = vpack.c.b16 %v1347, %v1342
    %v1653 = vpack.c.b16 %v1348, %v1343
    %v1654 = vpack.c.b16 %v1354, %v1349
    %v1655 = vpack.c.b16 %v1355, %v1350
    %v1656 = vpack.c.b16 %v1356, %v1351
    %v1657 = vpack.c.b16 %v1357, %v1352
    %v1658 = vpack.c.b16 %v1358, %v1353
    %v1659 = vpack.c.b16 %v1364, %v1359
    %v1660 = vpack.c.b16 %v1365, %v1360
    %v1661 = vpack.c.b16 %v1366, %v1361
    %v1662 = vpack.c.b16 %v1367, %v1362
    %v1663 = vpack.c.b16 %v1368, %v1363
    %v1664 = vpack.c.b16 %v1374, %v1369
    %v1665 = vpack.c.b16 %v1375, %v1370
    %v1666 = vpack.c.b16 %v1376, %v1371
    %v1667 = vpack.c.b16 %v1377, %v1372
    %v1668 = vpack.c.b16 %v1378, %v1373
    %v1669 = vpack.c.b16 %v1384, %v1379
    %v1670 = vpack.c.b16 %v1385, %v1380
    %v1671 = vpack.c.b16 %v1386, %v1381
    %v1672 = vpack.c.b16 %v1387, %v1382
    %v1673 = vpack.c.b16 %v1388, %v1383
    %v1674 = vpack.c.b16 %v1394, %v1389
    %v1675 = vpack.c.b16 %v1395, %v1390
    %v1676 = vpack.c.b16 %v1396, %v1391
    %v1677 = vpack.c.b16 %v1397, %v1392
    %v1678 = vpack.c.b16 %v1398, %v1393
    %v1679 = vpack.c.b16 %v1404, %v1399
    %v1680 = vpack.c.b16 %v1405, %v1400
    %v1681 = vpack.c.b16 %v1406, %v1401
    %v1682 = vpack.c.b16 %v1407, %v1402
    %v1683 = vpack.c.b16 %v1408, %v1403
    %v1684 = vpack.c.b16 %v1414, %v1409
    %v1685 = vpack.c.b16 %v1415, %v1410
    %v1686 = vpack.c.b16 %v1416, %v1411
    %v1687 = vpack.c.b16 %v1417, %v1412
    %v1688 = vpack.c.b16 %v1418, %v1413
    %v1689 = vpack.c.b16 %v1424, %v1419
    %v1690 = vpack.c.b16 %v1425, %v1420
    %v1691 = vpack.c.b16 %v1426, %v1421
    %v1692 = vpack.c.b16 %v1427, %v1422
    %v1693 = vpack.c.b16 %v1428, %v1423
    %v1694 = vpack.c.b16 %v1434, %v1429
    %v1695 = vpack.c.b16 %v1435, %v1430
    %v1696 = vpack.c.b16 %v1436, %v1431
    %v1697 = vpack.c.b16 %v1437, %v1432
    %v1698 = vpack.c.b16 %v1438, %v1433
    %v1699 = vpack.c.b16 %v1444, %v1439
    %v1700 = vpack.c.b16 %v1445, %v1440
    %v1701 = vpack.c.b16 %v1446, %v1441
    %v1702 = vpack.c.b16 %v1447, %v1442
    %v1703 = vpack.c.b16 %v1448, %v1443
    %v1704 = vpack.c.b16 %v1454, %v1449
    %v1705 = vpack.c.b16 %v1455, %v1450
    %v1706 = vpack.c.b16 %v1456, %v1451
    %v1707 = vpack.c.b16 %v1457, %v1452
    %v1708 = vpack.c.b16 %v1458, %v1453
    %vm1959 = vcmask 261120
    %v1961 = vsel %vm1959, %v331, 0
    %1963 = vmatprep.subr.bf16.mxu0 %v1460
    %1964 = vmatpush1.bf16.msra.mxu0 %v1459
    %1965 = vmatprep.subr.bf16.mxu0 %v1465
    %1966 = vmatpush1.bf16.msra.mxu0 %v1464
    %1967 = vmatprep.subr.bf16.mxu0 %v1470
    %1968 = vmatpush1.bf16.msra.mxu0 %v1469
    %1969 = vmatprep.subr.bf16.mxu0 %v1475
    %1970 = vmatpush1.bf16.msra.mxu0 %v1474
    %1971 = vmatprep.subr.bf16.mxu0 %v1480
    %1972 = vmatpush1.bf16.msra.mxu0 %v1479
    %1973 = vmatprep.subr.bf16.mxu0 %v1485
    %1974 = vmatpush1.bf16.msra.mxu0 %v1484
    %1975 = vmatprep.subr.bf16.mxu0 %v1490
    %1976 = vmatpush1.bf16.msra.mxu0 %v1489
    %1977 = vmatprep.subr.bf16.mxu0 %v1495
    %1978 = vmatpush1.bf16.msra.mxu0 %v1494
    %1979 = vmatprep.subr.bf16.mxu0 %v1500
    %1980 = vmatpush1.bf16.msra.mxu0 %v1499
    %1981 = vmatprep.subr.bf16.mxu0 %v1505
    %1982 = vmatpush1.bf16.msra.mxu0 %v1504
    %1983 = vmatprep.subr.bf16.mxu0 %v1510
    %1984 = vmatpush1.bf16.msra.mxu0 %v1509
    %1985 = vmatprep.subr.bf16.mxu0 %v1515
    %1986 = vmatpush1.bf16.msra.mxu0 %v1514
    %1987 = vmatprep.subr.bf16.mxu0 %v1520
    %1988 = vmatpush1.bf16.msra.mxu0 %v1519
    %1989 = vmatprep.subr.bf16.mxu0 %v1525
    %1990 = vmatpush1.bf16.msra.mxu0 %v1524
    %1991 = vmatprep.subr.bf16.mxu0 %v1530
    %1992 = vmatpush1.bf16.msra.mxu0 %v1529
    %1993 = vmatprep.subr.bf16.mxu0 %v1535
    %1994 = vmatpush1.bf16.msra.mxu0 %v1534
    %1995 = vmatprep.mubr.bf16.mxu0 %v326
    %1996 = vmatmul.mubr.bf16.gmra.mrb[0].mxu0 %v325
    %v1997 = vpop.f32.mrb[0].mxu0
    %v1998 = vadd.f32 %v637, %v1997
    %v1999 = vpop.f32.mrb[0].mxu0
    %v2000 = vadd.f32 %v641, %v1999
    %v2001 = vpop.f32.mrb[0].mxu0
    %v2002 = vpop.f32.mrb[0].mxu0
    %2003 = vdwg.mxu0
    %2004 = vmatprep.subr.bf16.mxu0 %v1540
    %2005 = vmatpush1.bf16.msra.mxu0 %v1539
    %2006 = vmatprep.subr.bf16.mxu0 %v1545
    %2007 = vmatpush1.bf16.msra.mxu0 %v1544
    %2008 = vmatprep.subr.bf16.mxu0 %v1550
    %2009 = vmatpush1.bf16.msra.mxu0 %v1549
    %2010 = vmatprep.subr.bf16.mxu0 %v1555
    %2011 = vmatpush1.bf16.msra.mxu0 %v1554
    %2012 = vmatprep.subr.bf16.mxu0 %v1560
    %2013 = vmatpush1.bf16.msra.mxu0 %v1559
    %2014 = vmatprep.subr.bf16.mxu0 %v1565
    %2015 = vmatpush1.bf16.msra.mxu0 %v1564
    %2016 = vmatprep.subr.bf16.mxu0 %v1570
    %2017 = vmatpush1.bf16.msra.mxu0 %v1569
    %2018 = vmatprep.subr.bf16.mxu0 %v1575
    %2019 = vmatpush1.bf16.msra.mxu0 %v1574
    %2020 = vmatprep.subr.bf16.mxu0 %v1580
    %2021 = vmatpush1.bf16.msra.mxu0 %v1579
    %2022 = vmatprep.subr.bf16.mxu0 %v1585
    %2023 = vmatpush1.bf16.msra.mxu0 %v1584
    %2024 = vmatprep.subr.bf16.mxu0 %v1590
    %2025 = vmatpush1.bf16.msra.mxu0 %v1589
    %2026 = vmatprep.subr.bf16.mxu0 %v1595
    %2027 = vmatpush1.bf16.msra.mxu0 %v1594
    %2028 = vmatprep.subr.bf16.mxu0 %v1600
    %2029 = vmatpush1.bf16.msra.mxu0 %v1599
    %2030 = vmatprep.subr.bf16.mxu0 %v1605
    %2031 = vmatpush1.bf16.msra.mxu0 %v1604
    %2032 = vmatprep.subr.bf16.mxu0 %v1610
    %2033 = vmatpush1.bf16.msra.mxu0 %v1609
    %2034 = vmatprep.subr.bf16.mxu0 %v1615
    %2035 = vmatpush1.bf16.msra.mxu0 %v1614
    %2036 = vmatprep.mubr.bf16.mxu0 %v328
    %2037 = vmatmul.mubr.bf16.gmra.mrb[0].mxu0 %v327
    %v2038 = vpop.f32.mrb[0].mxu0
    %v2039 = vadd.f32 %v1998, %v2038
    %v2040 = vpop.f32.mrb[0].mxu0
    %v2041 = vadd.f32 %v2000, %v2040
    %v2042 = vpop.f32.mrb[0].mxu0
    %v2043 = vpop.f32.mrb[0].mxu0
    %2044 = vdwg.mxu0
    %2045 = vmatprep.subr.bf16.mxu0 %v1620
    %2046 = vmatpush1.bf16.msra.mxu0 %v1619
    %2047 = vmatprep.subr.bf16.mxu0 %v1625
    %2048 = vmatpush1.bf16.msra.mxu0 %v1624
    %2049 = vmatprep.subr.bf16.mxu0 %v1630
    %2050 = vmatpush1.bf16.msra.mxu0 %v1629
    %2051 = vmatprep.subr.bf16.mxu0 %v1635
    %2052 = vmatpush1.bf16.msra.mxu0 %v1634
    %2053 = vmatprep.subr.bf16.mxu0 %v1640
    %2054 = vmatpush1.bf16.msra.mxu0 %v1639
    %2055 = vmatprep.subr.bf16.mxu0 %v1645
    %2056 = vmatpush1.bf16.msra.mxu0 %v1644
    %2057 = vmatprep.subr.bf16.mxu0 %v1650
    %2058 = vmatpush1.bf16.msra.mxu0 %v1649
    %2059 = vmatprep.subr.bf16.mxu0 %v1655
    %2060 = vmatpush1.bf16.msra.mxu0 %v1654
    %2061 = vmatprep.subr.bf16.mxu0 %v1660
    %2062 = vmatpush1.bf16.msra.mxu0 %v1659
    %2063 = vmatprep.subr.bf16.mxu0 %v1665
    %2064 = vmatpush1.bf16.msra.mxu0 %v1664
    %2065 = vmatprep.subr.bf16.mxu0 %v1670
    %2066 = vmatpush1.bf16.msra.mxu0 %v1669
    %2067 = vmatprep.subr.bf16.mxu0 %v1675
    %2068 = vmatpush1.bf16.msra.mxu0 %v1674
    %2069 = vmatprep.subr.bf16.mxu0 %v1680
    %2070 = vmatpush1.bf16.msra.mxu0 %v1679
    %2071 = vmatprep.subr.bf16.mxu0 %v1685
    %2072 = vmatpush1.bf16.msra.mxu0 %v1684
    %2073 = vmatprep.subr.bf16.mxu0 %v1690
    %2074 = vmatpush1.bf16.msra.mxu0 %v1689
    %2075 = vmatprep.subr.bf16.mxu0 %v1695
    %2076 = vmatpush1.bf16.msra.mxu0 %v1694
    %2077 = vmatprep.mubr.bf16.mxu0 %v330
    %2078 = vmatmul.mubr.bf16.gmra.mrb[0].mxu0 %v329
    %v2079 = vpop.f32.mrb[0].mxu0
    %v2080 = vadd.f32 %v2039, %v2079
    %v2081 = vpop.f32.mrb[0].mxu0
    %v2082 = vadd.f32 %v2041, %v2081
    %v2083 = vpop.f32.mrb[0].mxu0
    %v2084 = vpop.f32.mrb[0].mxu0
    %2085 = vdwg.mxu0
    %2086 = vmatprep.subr.bf16.mxu0 %v1700
    %2087 = vmatpush1.bf16.msra.mxu0 %v1699
    %2088 = vmatprep.subr.bf16.mxu0 %v1705
    %2089 = vmatpush1.bf16.msra.mxu0 %v1704
    %2090 = vmatprep.subr.bf16.mxu0 0
    %2091 = vmatpush1.bf16.msra.mxu0 0
    %2092 = vmatprep.subr.bf16.mxu0 0
    %2093 = vmatpush1.bf16.msra.mxu0 0
    %2094 = vmatprep.subr.bf16.mxu0 0
    %2095 = vmatpush1.bf16.msra.mxu0 0
    %2096 = vmatprep.subr.bf16.mxu0 0
    %2097 = vmatpush1.bf16.msra.mxu0 0
    %2098 = vmatprep.subr.bf16.mxu0 0
    %2099 = vmatpush1.bf16.msra.mxu0 0
    %2100 = vmatprep.subr.bf16.mxu0 0
    %2101 = vmatpush1.bf16.msra.mxu0 0
    %2102 = vmatprep.subr.bf16.mxu0 0
    %2103 = vmatpush1.bf16.msra.mxu0 0
    %2104 = vmatprep.subr.bf16.mxu0 0
    %2105 = vmatpush1.bf16.msra.mxu0 0
    %2106 = vmatprep.subr.bf16.mxu0 0
    %2107 = vmatpush1.bf16.msra.mxu0 0
    %2108 = vmatprep.subr.bf16.mxu0 0
    %2109 = vmatpush1.bf16.msra.mxu0 0
    %2110 = vmatprep.subr.bf16.mxu0 0
    %2111 = vmatpush1.bf16.msra.mxu0 0
    %2112 = vmatprep.subr.bf16.mxu0 0
    %2113 = vmatpush1.bf16.msra.mxu0 0
    %2114 = vmatprep.subr.bf16.mxu0 0
    %2115 = vmatpush1.bf16.msra.mxu0 0
    %2116 = vmatprep.subr.bf16.mxu0 0
    %2117 = vmatpush1.bf16.msra.mxu0 0
    %2118 = vmatprep.mubr.bf16.mxu0 0
    %2119 = vmatmul.mubr.bf16.gmra.mrb[0].mxu0 %v1961
    %v2120 = vpop.f32.mrb[0].mxu0
    %v2121 = vadd.f32 %v2080, %v2120
    %v2122 = vpop.f32.mrb[0].mxu0
    %v2123 = vadd.f32 %v2082, %v2122
    %v2124 = vpop.f32.mrb[0].mxu0
    %v2125 = vpop.f32.mrb[0].mxu0
    %2126 = vdwg.mxu0
    %2127 = vmatprep.subr.bf16.mxu0 %v1462
    %2128 = vmatpush1.bf16.msra.mxu0 %v1461
    %2129 = vmatprep.subr.bf16.mxu0 %v1467
    %2130 = vmatpush1.bf16.msra.mxu0 %v1466
    %2131 = vmatprep.subr.bf16.mxu0 %v1472
    %2132 = vmatpush1.bf16.msra.mxu0 %v1471
    %2133 = vmatprep.subr.bf16.mxu0 %v1477
    %2134 = vmatpush1.bf16.msra.mxu0 %v1476
    %2135 = vmatprep.subr.bf16.mxu0 %v1482
    %2136 = vmatpush1.bf16.msra.mxu0 %v1481
    %2137 = vmatprep.subr.bf16.mxu0 %v1487
    %2138 = vmatpush1.bf16.msra.mxu0 %v1486
    %2139 = vmatprep.subr.bf16.mxu0 %v1492
    %2140 = vmatpush1.bf16.msra.mxu0 %v1491
    %2141 = vmatprep.subr.bf16.mxu0 %v1497
    %2142 = vmatpush1.bf16.msra.mxu0 %v1496
    %2143 = vmatprep.subr.bf16.mxu0 %v1502
    %2144 = vmatpush1.bf16.msra.mxu0 %v1501
    %2145 = vmatprep.subr.bf16.mxu0 %v1507
    %2146 = vmatpush1.bf16.msra.mxu0 %v1506
    %2147 = vmatprep.subr.bf16.mxu0 %v1512
    %2148 = vmatpush1.bf16.msra.mxu0 %v1511
    %2149 = vmatprep.subr.bf16.mxu0 %v1517
    %2150 = vmatpush1.bf16.msra.mxu0 %v1516
    %2151 = vmatprep.subr.bf16.mxu0 %v1522
    %2152 = vmatpush1.bf16.msra.mxu0 %v1521
    %2153 = vmatprep.subr.bf16.mxu0 %v1527
    %2154 = vmatpush1.bf16.msra.mxu0 %v1526
    %2155 = vmatprep.subr.bf16.mxu0 %v1532
    %2156 = vmatpush1.bf16.msra.mxu0 %v1531
    %2157 = vmatprep.subr.bf16.mxu0 %v1537
    %2158 = vmatpush1.bf16.msra.mxu0 %v1536
    %2159 = vmatprep.mubr.bf16.mxu0 %v326
    %2160 = vmatmul.mubr.bf16.gmra.mrb[0].mxu0 %v325
    %v2161 = vpop.f32.mrb[0].mxu0
    %v2162 = vadd.f32 %v645, %v2161
    %v2163 = vpop.f32.mrb[0].mxu0
    %v2164 = vadd.f32 %v649, %v2163
    %v2165 = vpop.f32.mrb[0].mxu0
    %v2166 = vpop.f32.mrb[0].mxu0
    %2167 = vdwg.mxu0
    %2168 = vmatprep.subr.bf16.mxu0 %v1542
    %2169 = vmatpush1.bf16.msra.mxu0 %v1541
    %2170 = vmatprep.subr.bf16.mxu0 %v1547
    %2171 = vmatpush1.bf16.msra.mxu0 %v1546
    %2172 = vmatprep.subr.bf16.mxu0 %v1552
    %2173 = vmatpush1.bf16.msra.mxu0 %v1551
    %2174 = vmatprep.subr.bf16.mxu0 %v1557
    %2175 = vmatpush1.bf16.msra.mxu0 %v1556
    %2176 = vmatprep.subr.bf16.mxu0 %v1562
    %2177 = vmatpush1.bf16.msra.mxu0 %v1561
    %2178 = vmatprep.subr.bf16.mxu0 %v1567
    %2179 = vmatpush1.bf16.msra.mxu0 %v1566
    %2180 = vmatprep.subr.bf16.mxu0 %v1572
    %2181 = vmatpush1.bf16.msra.mxu0 %v1571
    %2182 = vmatprep.subr.bf16.mxu0 %v1577
    %2183 = vmatpush1.bf16.msra.mxu0 %v1576
    %2184 = vmatprep.subr.bf16.mxu0 %v1582
    %2185 = vmatpush1.bf16.msra.mxu0 %v1581
    %2186 = vmatprep.subr.bf16.mxu0 %v1587
    %2187 = vmatpush1.bf16.msra.mxu0 %v1586
    %2188 = vmatprep.subr.bf16.mxu0 %v1592
    %2189 = vmatpush1.bf16.msra.mxu0 %v1591
    %2190 = vmatprep.subr.bf16.mxu0 %v1597
    %2191 = vmatpush1.bf16.msra.mxu0 %v1596
    %2192 = vmatprep.subr.bf16.mxu0 %v1602
    %2193 = vmatpush1.bf16.msra.mxu0 %v1601
    %2194 = vmatprep.subr.bf16.mxu0 %v1607
    %2195 = vmatpush1.bf16.msra.mxu0 %v1606
    %2196 = vmatprep.subr.bf16.mxu0 %v1612
    %2197 = vmatpush1.bf16.msra.mxu0 %v1611
    %2198 = vmatprep.subr.bf16.mxu0 %v1617
    %2199 = vmatpush1.bf16.msra.mxu0 %v1616
    %2200 = vmatprep.mubr.bf16.mxu0 %v328
    %2201 = vmatmul.mubr.bf16.gmra.mrb[0].mxu0 %v327
    %v2202 = vpop.f32.mrb[0].mxu0
    %v2203 = vadd.f32 %v2162, %v2202
    %v2204 = vpop.f32.mrb[0].mxu0
    %v2205 = vadd.f32 %v2164, %v2204
    %v2206 = vpop.f32.mrb[0].mxu0
    %v2207 = vpop.f32.mrb[0].mxu0
    %2208 = vdwg.mxu0
    %2209 = vmatprep.subr.bf16.mxu0 %v1622
    %2210 = vmatpush1.bf16.msra.mxu0 %v1621
    %2211 = vmatprep.subr.bf16.mxu0 %v1627
    %2212 = vmatpush1.bf16.msra.mxu0 %v1626
    %2213 = vmatprep.subr.bf16.mxu0 %v1632
    %2214 = vmatpush1.bf16.msra.mxu0 %v1631
    %2215 = vmatprep.subr.bf16.mxu0 %v1637
    %2216 = vmatpush1.bf16.msra.mxu0 %v1636
    %2217 = vmatprep.subr.bf16.mxu0 %v1642
    %2218 = vmatpush1.bf16.msra.mxu0 %v1641
    %2219 = vmatprep.subr.bf16.mxu0 %v1647
    %2220 = vmatpush1.bf16.msra.mxu0 %v1646
    %2221 = vmatprep.subr.bf16.mxu0 %v1652
    %2222 = vmatpush1.bf16.msra.mxu0 %v1651
    %2223 = vmatprep.subr.bf16.mxu0 %v1657
    %2224 = vmatpush1.bf16.msra.mxu0 %v1656
    %2225 = vmatprep.subr.bf16.mxu0 %v1662
    %2226 = vmatpush1.bf16.msra.mxu0 %v1661
    %2227 = vmatprep.subr.bf16.mxu0 %v1667
    %2228 = vmatpush1.bf16.msra.mxu0 %v1666
    %2229 = vmatprep.subr.bf16.mxu0 %v1672
    %2230 = vmatpush1.bf16.msra.mxu0 %v1671
    %2231 = vmatprep.subr.bf16.mxu0 %v1677
    %2232 = vmatpush1.bf16.msra.mxu0 %v1676
    %2233 = vmatprep.subr.bf16.mxu0 %v1682
    %2234 = vmatpush1.bf16.msra.mxu0 %v1681
    %2235 = vmatprep.subr.bf16.mxu0 %v1687
    %2236 = vmatpush1.bf16.msra.mxu0 %v1686
    %2237 = vmatprep.subr.bf16.mxu0 %v1692
    %2238 = vmatpush1.bf16.msra.mxu0 %v1691
    %2239 = vmatprep.subr.bf16.mxu0 %v1697
    %2240 = vmatpush1.bf16.msra.mxu0 %v1696
    %2241 = vmatprep.mubr.bf16.mxu0 %v330
    %2242 = vmatmul.mubr.bf16.gmra.mrb[0].mxu0 %v329
    %v2243 = vpop.f32.mrb[0].mxu0
    %v2244 = vadd.f32 %v2203, %v2243
    %v2245 = vpop.f32.mrb[0].mxu0
    %v2246 = vadd.f32 %v2205, %v2245
    %v2247 = vpop.f32.mrb[0].mxu0
    %v2248 = vpop.f32.mrb[0].mxu0
    %2249 = vdwg.mxu0
    %2250 = vmatprep.subr.bf16.mxu0 %v1702
    %2251 = vmatpush1.bf16.msra.mxu0 %v1701
    %2252 = vmatprep.subr.bf16.mxu0 %v1707
    %2253 = vmatpush1.bf16.msra.mxu0 %v1706
    %2254 = vmatprep.subr.bf16.mxu0 0
    %2255 = vmatpush1.bf16.msra.mxu0 0
    %2256 = vmatprep.subr.bf16.mxu0 0
    %2257 = vmatpush1.bf16.msra.mxu0 0
    %2258 = vmatprep.subr.bf16.mxu0 0
    %2259 = vmatpush1.bf16.msra.mxu0 0
    %2260 = vmatprep.subr.bf16.mxu0 0
    %2261 = vmatpush1.bf16.msra.mxu0 0
    %2262 = vmatprep.subr.bf16.mxu0 0
    %2263 = vmatpush1.bf16.msra.mxu0 0
    %2264 = vmatprep.subr.bf16.mxu0 0
    %2265 = vmatpush1.bf16.msra.mxu0 0
    %2266 = vmatprep.subr.bf16.mxu0 0
    %2267 = vmatpush1.bf16.msra.mxu0 0
    %2268 = vmatprep.subr.bf16.mxu0 0
    %2269 = vmatpush1.bf16.msra.mxu0 0
    %2270 = vmatprep.subr.bf16.mxu0 0
    %2271 = vmatpush1.bf16.msra.mxu0 0
    %2272 = vmatprep.subr.bf16.mxu0 0
    %2273 = vmatpush1.bf16.msra.mxu0 0
    %2274 = vmatprep.subr.bf16.mxu0 0
    %2275 = vmatpush1.bf16.msra.mxu0 0
    %2276 = vmatprep.subr.bf16.mxu0 0
    %2277 = vmatpush1.bf16.msra.mxu0 0
    %2278 = vmatprep.subr.bf16.mxu0 0
    %2279 = vmatpush1.bf16.msra.mxu0 0
    %2280 = vmatprep.subr.bf16.mxu0 0
    %2281 = vmatpush1.bf16.msra.mxu0 0
    %2282 = vmatprep.mubr.bf16.mxu0 0
    %2283 = vmatmul.mubr.bf16.gmra.mrb[0].mxu0 %v1961
    %v2284 = vpop.f32.mrb[0].mxu0
    %v2285 = vadd.f32 %v2244, %v2284
    %v2286 = vpop.f32.mrb[0].mxu0
    %v2287 = vadd.f32 %v2246, %v2286
    %v2288 = vpop.f32.mrb[0].mxu0
    %v2289 = vpop.f32.mrb[0].mxu0
    %2290 = vdwg.mxu0
    %2291 = vmatprep.subr.bf16.mxu0 0
    %2292 = vmatpush1.bf16.msra.mxu0 %v1463
    %2293 = vmatprep.subr.bf16.mxu0 0
    %2294 = vmatpush1.bf16.msra.mxu0 %v1468
    %2295 = vmatprep.subr.bf16.mxu0 0
    %2296 = vmatpush1.bf16.msra.mxu0 %v1473
    %2297 = vmatprep.subr.bf16.mxu0 0
    %2298 = vmatpush1.bf16.msra.mxu0 %v1478
    %2299 = vmatprep.subr.bf16.mxu0 0
    %2300 = vmatpush1.bf16.msra.mxu0 %v1483
    %2301 = vmatprep.subr.bf16.mxu0 0
    %2302 = vmatpush1.bf16.msra.mxu0 %v1488
    %2303 = vmatprep.subr.bf16.mxu0 0
    %2304 = vmatpush1.bf16.msra.mxu0 %v1493
    %2305 = vmatprep.subr.bf16.mxu0 0
    %2306 = vmatpush1.bf16.msra.mxu0 %v1498
    %2307 = vmatprep.subr.bf16.mxu0 0
    %2308 = vmatpush1.bf16.msra.mxu0 %v1503
    %2309 = vmatprep.subr.bf16.mxu0 0
    %2310 = vmatpush1.bf16.msra.mxu0 %v1508
    %2311 = vmatprep.subr.bf16.mxu0 0
    %2312 = vmatpush1.bf16.msra.mxu0 %v1513
    %2313 = vmatprep.subr.bf16.mxu0 0
    %2314 = vmatpush1.bf16.msra.mxu0 %v1518
    %2315 = vmatprep.subr.bf16.mxu0 0
    %2316 = vmatpush1.bf16.msra.mxu0 %v1523
    %2317 = vmatprep.subr.bf16.mxu0 0
    %2318 = vmatpush1.bf16.msra.mxu0 %v1528
    %2319 = vmatprep.subr.bf16.mxu0 0
    %2320 = vmatpush1.bf16.msra.mxu0 %v1533
    %2321 = vmatprep.subr.bf16.mxu0 0
    %2322 = vmatpush1.bf16.msra.mxu0 %v1538
    %2323 = vmatprep.mubr.bf16.mxu0 %v326
    %2324 = vmatmul.mubr.bf16.gmra.mrb[0].mxu0 %v325
    %v2325 = vpop.f32.mrb[0].mxu0
    %v2326 = vadd.f32 %v653, %v2325
    %v2327 = vpop.f32.mrb[0].mxu0
    %v2328 = vpop.f32.mrb[0].mxu0
    %v2329 = vpop.f32.mrb[0].mxu0
    %2330 = vdwg.mxu0
    %2331 = vmatprep.subr.bf16.mxu0 0
    %2332 = vmatpush1.bf16.msra.mxu0 %v1543
    %2333 = vmatprep.subr.bf16.mxu0 0
    %2334 = vmatpush1.bf16.msra.mxu0 %v1548
    %2335 = vmatprep.subr.bf16.mxu0 0
    %2336 = vmatpush1.bf16.msra.mxu0 %v1553
    %2337 = vmatprep.subr.bf16.mxu0 0
    %2338 = vmatpush1.bf16.msra.mxu0 %v1558
    %2339 = vmatprep.subr.bf16.mxu0 0
    %2340 = vmatpush1.bf16.msra.mxu0 %v1563
    %2341 = vmatprep.subr.bf16.mxu0 0
    %2342 = vmatpush1.bf16.msra.mxu0 %v1568
    %2343 = vmatprep.subr.bf16.mxu0 0
    %2344 = vmatpush1.bf16.msra.mxu0 %v1573
    %2345 = vmatprep.subr.bf16.mxu0 0
    %2346 = vmatpush1.bf16.msra.mxu0 %v1578
    %2347 = vmatprep.subr.bf16.mxu0 0
    %2348 = vmatpush1.bf16.msra.mxu0 %v1583
    %2349 = vmatprep.subr.bf16.mxu0 0
    %2350 = vmatpush1.bf16.msra.mxu0 %v1588
    %2351 = vmatprep.subr.bf16.mxu0 0
    %2352 = vmatpush1.bf16.msra.mxu0 %v1593
    %2353 = vmatprep.subr.bf16.mxu0 0
    %2354 = vmatpush1.bf16.msra.mxu0 %v1598
    %2355 = vmatprep.subr.bf16.mxu0 0
    %2356 = vmatpush1.bf16.msra.mxu0 %v1603
    %2357 = vmatprep.subr.bf16.mxu0 0
    %2358 = vmatpush1.bf16.msra.mxu0 %v1608
    %2359 = vmatprep.subr.bf16.mxu0 0
    %2360 = vmatpush1.bf16.msra.mxu0 %v1613
    %2361 = vmatprep.subr.bf16.mxu0 0
    %2362 = vmatpush1.bf16.msra.mxu0 %v1618
    %2363 = vmatprep.mubr.bf16.mxu0 %v328
    %2364 = vmatmul.mubr.bf16.gmra.mrb[0].mxu0 %v327
    %v2365 = vpop.f32.mrb[0].mxu0
    %v2366 = vadd.f32 %v2326, %v2365
    %v2367 = vpop.f32.mrb[0].mxu0
    %v2368 = vpop.f32.mrb[0].mxu0
    %v2369 = vpop.f32.mrb[0].mxu0
    %2370 = vdwg.mxu0
    %2371 = vmatprep.subr.bf16.mxu0 0
    %2372 = vmatpush1.bf16.msra.mxu0 %v1623
    %2373 = vmatprep.subr.bf16.mxu0 0
    %2374 = vmatpush1.bf16.msra.mxu0 %v1628
    %2375 = vmatprep.subr.bf16.mxu0 0
    %2376 = vmatpush1.bf16.msra.mxu0 %v1633
    %2377 = vmatprep.subr.bf16.mxu0 0
    %2378 = vmatpush1.bf16.msra.mxu0 %v1638
    %2379 = vmatprep.subr.bf16.mxu0 0
    %2380 = vmatpush1.bf16.msra.mxu0 %v1643
    %2381 = vmatprep.subr.bf16.mxu0 0
    %2382 = vmatpush1.bf16.msra.mxu0 %v1648
    %2383 = vmatprep.subr.bf16.mxu0 0
    %2384 = vmatpush1.bf16.msra.mxu0 %v1653
    %2385 = vmatprep.subr.bf16.mxu0 0
    %2386 = vmatpush1.bf16.msra.mxu0 %v1658
    %2387 = vmatprep.subr.bf16.mxu0 0
    %2388 = vmatpush1.bf16.msra.mxu0 %v1663
    %2389 = vmatprep.subr.bf16.mxu0 0
    %2390 = vmatpush1.bf16.msra.mxu0 %v1668
    %2391 = vmatprep.subr.bf16.mxu0 0
    %2392 = vmatpush1.bf16.msra.mxu0 %v1673
    %2393 = vmatprep.subr.bf16.mxu0 0
    %2394 = vmatpush1.bf16.msra.mxu0 %v1678
    %2395 = vmatprep.subr.bf16.mxu0 0
    %2396 = vmatpush1.bf16.msra.mxu0 %v1683
    %2397 = vmatprep.subr.bf16.mxu0 0
    %2398 = vmatpush1.bf16.msra.mxu0 %v1688
    %2399 = vmatprep.subr.bf16.mxu0 0
    %2400 = vmatpush1.bf16.msra.mxu0 %v1693
    %2401 = vmatprep.subr.bf16.mxu0 0
    %2402 = vmatpush1.bf16.msra.mxu0 %v1698
    %2403 = vmatprep.mubr.bf16.mxu0 %v330
    %2404 = vmatmul.mubr.bf16.gmra.mrb[0].mxu0 %v329
    %v2405 = vpop.f32.mrb[0].mxu0
    %v2406 = vadd.f32 %v2366, %v2405
    %v2407 = vpop.f32.mrb[0].mxu0
    %v2408 = vpop.f32.mrb[0].mxu0
    %v2409 = vpop.f32.mrb[0].mxu0
    %2410 = vdwg.mxu0
    %2411 = vmatprep.subr.bf16.mxu0 0
    %2412 = vmatpush1.bf16.msra.mxu0 %v1703
    %2413 = vmatprep.subr.bf16.mxu0 0
    %2414 = vmatpush1.bf16.msra.mxu0 %v1708
    %2415 = vmatprep.subr.bf16.mxu0 0
    %2416 = vmatpush1.bf16.msra.mxu0 0
    %2417 = vmatprep.subr.bf16.mxu0 0
    %2418 = vmatpush1.bf16.msra.mxu0 0
    %2419 = vmatprep.subr.bf16.mxu0 0
    %2420 = vmatpush1.bf16.msra.mxu0 0
    %2421 = vmatprep.subr.bf16.mxu0 0
    %2422 = vmatpush1.bf16.msra.mxu0 0
    %2423 = vmatprep.subr.bf16.mxu0 0
    %2424 = vmatpush1.bf16.msra.mxu0 0
    %2425 = vmatprep.subr.bf16.mxu0 0
    %2426 = vmatpush1.bf16.msra.mxu0 0
    %2427 = vmatprep.subr.bf16.mxu0 0
    %2428 = vmatpush1.bf16.msra.mxu0 0
    %2429 = vmatprep.subr.bf16.mxu0 0
    %2430 = vmatpush1.bf16.msra.mxu0 0
    %2431 = vmatprep.subr.bf16.mxu0 0
    %2432 = vmatpush1.bf16.msra.mxu0 0
    %2433 = vmatprep.subr.bf16.mxu0 0
    %2434 = vmatpush1.bf16.msra.mxu0 0
    %2435 = vmatprep.subr.bf16.mxu0 0
    %2436 = vmatpush1.bf16.msra.mxu0 0
    %2437 = vmatprep.subr.bf16.mxu0 0
    %2438 = vmatpush1.bf16.msra.mxu0 0
    %2439 = vmatprep.subr.bf16.mxu0 0
    %2440 = vmatpush1.bf16.msra.mxu0 0
    %2441 = vmatprep.subr.bf16.mxu0 0
    %2442 = vmatpush1.bf16.msra.mxu0 0
    %2443 = vmatprep.mubr.bf16.mxu0 0
    %2444 = vmatmul.mubr.bf16.gmra.mrb[0].mxu0 %v1961
    %v2445 = vpop.f32.mrb[0].mxu0
    %v2446 = vadd.f32 %v2406, %v2445
    %v2447 = vpop.f32.mrb[0].mxu0
    %v2448 = vpop.f32.mrb[0].mxu0
    %v2449 = vpop.f32.mrb[0].mxu0
    %2450 = vdwg.mxu0
    %v2451 = vmax.f32 %v2121, 0.0
    %v2452 = vmax.f32 %v2123, 0.0
    %v2453 = vmax.f32 %v2285, 0.0
    %v2454 = vmax.f32 %v2287, 0.0
    %v2455 = vmax.f32 %v2446, 0.0
    %v2456 = vpack.c.bf16 %v2451, %v2451
    %v2457 = vpack.c.bf16 %v2452, %v2452
    %v2458 = vpack.c.bf16 %v2453, %v2453
    %v2459 = vpack.c.bf16 %v2454, %v2454
    %v2460 = vpack.c.bf16 %v2455, %v2455
    %v2461 = vld [vmem:[#allocation6] sm:$0xf]
    %v2462 = vld [vmem:[#allocation6 + $0x4] sm:$0xf]
    %v2463 = vld [vmem:[#allocation6 + $0x8] sm:$0xf]
    %v2464 = vld [vmem:[#allocation6 + $0xc] sm:$0xf]
    %v2465 = vld [vmem:[#allocation6 + $0x10] sm:$0xf]
    %v2466 = vld [vmem:[#allocation6 + $0x14] sm:$0xf]
    %v2467 = vld [vmem:[#allocation6 + $0x18] sm:$0xf]
    %v2468 = vld [vmem:[#allocation6 + $0x1c] sm:$0xf]
    %v2469 = vld [vmem:[#allocation6 + $0x20] sm:$0xf]
    %v2470 = vld [vmem:[#allocation6 + $0x24] sm:$0xf]
    %v2471 = vld [vmem:[#allocation6 + $0x28] sm:$0xf]
    %v2472 = vld [vmem:[#allocation6 + $0x2c] sm:$0xf]
    %v2473 = vld [vmem:[#allocation6 + $0x30] sm:$0xf]
    %v2474 = vld [vmem:[#allocation6 + $0x34] sm:$0xf]
    %v2475 = vld [vmem:[#allocation6 + $0x38] sm:$0xf]
    %v2476 = vld [vmem:[#allocation6 + $0x3c] sm:$0xf]
    %v2477 = vld [vmem:[#allocation6 + $0x40] sm:$0xf]
    %v2478 = vld [vmem:[#allocation6 + $0x44] sm:$0xf]
    %v2479 = vld [vmem:[#allocation6 + $0x48] sm:$0xf]
    %v2480 = vld [vmem:[#allocation6 + $0x4c] sm:$0xf]
    %v2481 = vld [vmem:[#allocation6 + $0x50] sm:$0xf]
    %v2482 = vld [vmem:[#allocation6 + $0x54] sm:$0xf]
    %v2483 = vld [vmem:[#allocation6 + $0x58] sm:$0xf]
    %v2484 = vld [vmem:[#allocation6 + $0x5c] sm:$0xf]
    %v2485 = vld [vmem:[#allocation6 + $0x60] sm:$0xf]
    %v2486 = vld [vmem:[#allocation6 + $0x64] sm:$0xf]
    %v2487 = vld [vmem:[#allocation6 + $0x68] sm:$0xf]
    %v2488 = vld [vmem:[#allocation6 + $0x6c] sm:$0xf]
    %v2489 = vld [vmem:[#allocation6 + $0x70] sm:$0xf]
    %v2490 = vld [vmem:[#allocation6 + $0x74] sm:$0xf]
    %v2491 = vld [vmem:[#allocation6 + $0x78] sm:$0xf]
    %v2492 = vld [vmem:[#allocation6 + $0x7c] sm:$0xf]
    %v2493 = vld [vmem:[#allocation6 + $0x80] sm:$0xf]
    %v2494 = vld [vmem:[#allocation6 + $0x84] sm:$0xf]
    %v2495 = vld [vmem:[#allocation6 + $0x88] sm:$0xf]
    %v2496 = vld [vmem:[#allocation6 + $0x8c] sm:$0xf]
    %v2497 = vld [vmem:[#allocation6 + $0x90] sm:$0xf]
    %v2498 = vld [vmem:[#allocation6 + $0x94] sm:$0xf]
    %v2499 = vld [vmem:[#allocation6 + $0x98] sm:$0xf]
    %v2500 = vld [vmem:[#allocation6 + $0x9c] sm:$0xf]
    %v2501 = vld [vmem:[#allocation6 + $0xa0] sm:$0xf]
    %v2502 = vld [vmem:[#allocation6 + $0xa4] sm:$0xf]
    %v2503 = vld [vmem:[#allocation6 + $0xa8] sm:$0xf]
    %v2504 = vld [vmem:[#allocation6 + $0xac] sm:$0xf]
    %v2505 = vld [vmem:[#allocation6 + $0xb0] sm:$0xf]
    %v2506 = vld [vmem:[#allocation6 + $0xb4] sm:$0xf]
    %v2507 = vld [vmem:[#allocation6 + $0xb8] sm:$0xf]
    %v2508 = vld [vmem:[#allocation6 + $0xbc] sm:$0xf]
    %v2509 = vld [vmem:[#allocation6 + $0xc0] sm:$0xf]
    %v2510 = vld [vmem:[#allocation6 + $0xc4] sm:$0xf]
    %v2511 = vld [vmem:[#allocation6 + $0xc8] sm:$0xf]
    %v2512 = vld [vmem:[#allocation6 + $0xcc] sm:$0xf]
    %v2513 = vld [vmem:[#allocation6 + $0xd0] sm:$0xf]
    %v2514 = vld [vmem:[#allocation6 + $0xd4] sm:$0xf]
    %v2515 = vld [vmem:[#allocation6 + $0xd8] sm:$0xf]
    %v2516 = vld [vmem:[#allocation6 + $0xdc] sm:$0xf]
    %v2517 = vld [vmem:[#allocation6 + $0xe0] sm:$0xf]
    %v2518 = vld [vmem:[#allocation6 + $0xe4] sm:$0xf]
    %v2519 = vld [vmem:[#allocation6 + $0xe8] sm:$0xf]
    %v2520 = vld [vmem:[#allocation6 + $0xec] sm:$0xf]
    %v2521 = vld [vmem:[#allocation6 + $0xf0] sm:$0xf]
    %v2522 = vld [vmem:[#allocation6 + $0xf4] sm:$0xf]
    %v2523 = vld [vmem:[#allocation6 + $0xf8] sm:$0xf]
    %v2524 = vld [vmem:[#allocation6 + $0xfc] sm:$0xf]
    %v2525 = vld [vmem:[#allocation6 + $0x100] sm:$0xf]
    %v2526 = vld [vmem:[#allocation6 + $0x104] sm:$0xf]
    %v2527 = vld [vmem:[#allocation6 + $0x108] sm:$0xf]
    %v2528 = vld [vmem:[#allocation6 + $0x10c] sm:$0xf]
    %v2529 = vld [vmem:[#allocation6 + $0x110] sm:$0xf]
    %v2530 = vld [vmem:[#allocation6 + $0x114] sm:$0xf]
    %v2531 = vld [vmem:[#allocation6 + $0x118] sm:$0xf]
    %v2532 = vld [vmem:[#allocation6 + $0x11c] sm:$0xf]
    %v2533 = vld [vmem:[#allocation6 + $0x120] sm:$0xf]
    %v2534 = vld [vmem:[#allocation6 + $0x124] sm:$0xf]
    %v2535 = vld [vmem:[#allocation6 + $0x128] sm:$0xf]
    %v2536 = vld [vmem:[%s6] sm:$0x1]
    %v2538 = vlaneseq
    %v2539 = vshrl.u32 %v2538, 7
    %v2540 = vsub.s32 0, %v2539
    %v2541 = vrot.slane %v2536, %v2540
    %v2618 = vunpack.c.l.b16 %v2461
    %v2619 = vunpack.c.l.b16 %v2462
    %v2620 = vunpack.c.l.b16 %v2463
    %v2621 = vunpack.c.l.b16 %v2464
    %v2622 = vunpack.c.l.b16 %v2465
    %v2623 = vunpack.c.l.b16 %v2466
    %v2624 = vunpack.c.l.b16 %v2467
    %v2625 = vunpack.c.l.b16 %v2468
    %v2626 = vunpack.c.l.b16 %v2469
    %v2627 = vunpack.c.l.b16 %v2470
    %v2628 = vunpack.c.l.b16 %v2471
    %v2629 = vunpack.c.l.b16 %v2472
    %v2630 = vunpack.c.l.b16 %v2473
    %v2631 = vunpack.c.l.b16 %v2474
    %v2632 = vunpack.c.l.b16 %v2475
    %v2633 = vunpack.c.l.b16 %v2476
    %v2634 = vunpack.c.l.b16 %v2477
    %v2635 = vunpack.c.l.b16 %v2478
    %v2636 = vunpack.c.l.b16 %v2479
    %v2637 = vunpack.c.l.b16 %v2480
    %v2638 = vunpack.c.l.b16 %v2481
    %v2639 = vunpack.c.l.b16 %v2482
    %v2640 = vunpack.c.l.b16 %v2483
    %v2641 = vunpack.c.l.b16 %v2484
    %v2642 = vunpack.c.l.b16 %v2485
    %v2643 = vunpack.c.l.b16 %v2486
    %v2644 = vunpack.c.l.b16 %v2487
    %v2645 = vunpack.c.l.b16 %v2488
    %v2646 = vunpack.c.l.b16 %v2489
    %v2647 = vunpack.c.l.b16 %v2490
    %v2648 = vunpack.c.l.b16 %v2491
    %v2649 = vunpack.c.l.b16 %v2492
    %v2650 = vunpack.c.l.b16 %v2493
    %v2651 = vunpack.c.l.b16 %v2494
    %v2652 = vunpack.c.l.b16 %v2495
    %v2653 = vunpack.c.l.b16 %v2496
    %v2654 = vunpack.c.l.b16 %v2497
    %v2655 = vunpack.c.l.b16 %v2498
    %v2656 = vunpack.c.l.b16 %v2499
    %v2657 = vunpack.c.l.b16 %v2500
    %v2658 = vunpack.c.l.b16 %v2501
    %v2659 = vunpack.c.l.b16 %v2502
    %v2660 = vunpack.c.l.b16 %v2503
    %v2661 = vunpack.c.l.b16 %v2504
    %v2662 = vunpack.c.l.b16 %v2505
    %v2663 = vunpack.c.l.b16 %v2506
    %v2664 = vunpack.c.l.b16 %v2507
    %v2665 = vunpack.c.l.b16 %v2508
    %v2666 = vunpack.c.l.b16 %v2509
    %v2667 = vunpack.c.l.b16 %v2510
    %v2668 = vunpack.c.l.b16 %v2511
    %v2669 = vunpack.c.l.b16 %v2512
    %v2670 = vunpack.c.l.b16 %v2513
    %v2671 = vunpack.c.l.b16 %v2514
    %v2672 = vunpack.c.l.b16 %v2515
    %v2673 = vunpack.c.l.b16 %v2516
    %v2674 = vunpack.c.l.b16 %v2517
    %v2675 = vunpack.c.l.b16 %v2518
    %v2676 = vunpack.c.l.b16 %v2519
    %v2677 = vunpack.c.l.b16 %v2520
    %v2678 = vunpack.c.l.b16 %v2521
    %v2679 = vunpack.c.l.b16 %v2522
    %v2680 = vunpack.c.l.b16 %v2523
    %v2681 = vunpack.c.l.b16 %v2524
    %v2682 = vunpack.c.l.b16 %v2525
    %v2683 = vunpack.c.l.b16 %v2526
    %v2684 = vunpack.c.l.b16 %v2527
    %v2685 = vunpack.c.l.b16 %v2528
    %v2686 = vunpack.c.l.b16 %v2529
    %v2687 = vunpack.c.l.b16 %v2530
    %v2688 = vunpack.c.l.b16 %v2531
    %v2689 = vunpack.c.l.b16 %v2532
    %v2690 = vunpack.c.l.b16 %v2533
    %v2691 = vunpack.c.l.b16 %v2534
    %v2692 = vunpack.c.l.b16 %v2535
    %v2693 = vpack.c.b16 %v2619, %v2618
    %v2694 = vpack.c.b16 %v2621, %v2620
    %v2695 = vpack.c.b16 %v2623, %v2622
    %v2696 = vpack.c.b16 %v2625, %v2624
    %v2697 = vpack.c.b16 %v2627, %v2626
    %v2698 = vpack.c.b16 %v2629, %v2628
    %v2699 = vpack.c.b16 %v2631, %v2630
    %v2700 = vpack.c.b16 %v2633, %v2632
    %v2701 = vpack.c.b16 %v2635, %v2634
    %v2702 = vpack.c.b16 %v2637, %v2636
    %v2703 = vpack.c.b16 %v2639, %v2638
    %v2704 = vpack.c.b16 %v2641, %v2640
    %v2705 = vpack.c.b16 %v2643, %v2642
    %v2706 = vpack.c.b16 %v2645, %v2644
    %v2707 = vpack.c.b16 %v2647, %v2646
    %v2708 = vpack.c.b16 %v2649, %v2648
    %v2709 = vpack.c.b16 %v2651, %v2650
    %v2710 = vpack.c.b16 %v2653, %v2652
    %v2711 = vpack.c.b16 %v2655, %v2654
    %v2712 = vpack.c.b16 %v2657, %v2656
    %v2713 = vpack.c.b16 %v2659, %v2658
    %v2714 = vpack.c.b16 %v2661, %v2660
    %v2715 = vpack.c.b16 %v2663, %v2662
    %v2716 = vpack.c.b16 %v2665, %v2664
    %v2717 = vpack.c.b16 %v2667, %v2666
    %v2718 = vpack.c.b16 %v2669, %v2668
    %v2719 = vpack.c.b16 %v2671, %v2670
    %v2720 = vpack.c.b16 %v2673, %v2672
    %v2721 = vpack.c.b16 %v2675, %v2674
    %v2722 = vpack.c.b16 %v2677, %v2676
    %v2723 = vpack.c.b16 %v2679, %v2678
    %v2724 = vpack.c.b16 %v2681, %v2680
    %v2725 = vpack.c.b16 %v2683, %v2682
    %v2726 = vpack.c.b16 %v2685, %v2684
    %v2727 = vpack.c.b16 %v2687, %v2686
    %v2728 = vpack.c.b16 %v2689, %v2688
    %v2729 = vpack.c.b16 %v2691, %v2690
    %v2730 = vpack.c.b16 %v2692, %v2692
    %vm2768 = vcmask 719872
    %v2770 = vsel %vm2768, %v2460, 0
    %vm2772 = vcmask 1043456
    %v2774 = vsel %vm2772, %v2730, 0
    %2776 = vmatprep.subr.bf16.mxu0 0
    %2777 = vmatpush1.bf16.msra.mxu0 %v2693
    %2778 = vmatprep.subr.bf16.mxu0 0
    %2779 = vmatpush1.bf16.msra.mxu0 %v2694
    %2780 = vmatprep.subr.bf16.mxu0 0
    %2781 = vmatpush1.bf16.msra.mxu0 %v2695
    %2782 = vmatprep.subr.bf16.mxu0 0
    %2783 = vmatpush1.bf16.msra.mxu0 %v2696
    %2784 = vmatprep.subr.bf16.mxu0 0
    %2785 = vmatpush1.bf16.msra.mxu0 %v2697
    %2786 = vmatprep.subr.bf16.mxu0 0
    %2787 = vmatpush1.bf16.msra.mxu0 %v2698
    %2788 = vmatprep.subr.bf16.mxu0 0
    %2789 = vmatpush1.bf16.msra.mxu0 %v2699
    %2790 = vmatprep.subr.bf16.mxu0 0
    %2791 = vmatpush1.bf16.msra.mxu0 %v2700
    %2792 = vmatprep.subr.bf16.mxu0 0
    %2793 = vmatpush1.bf16.msra.mxu0 %v2701
    %2794 = vmatprep.subr.bf16.mxu0 0
    %2795 = vmatpush1.bf16.msra.mxu0 %v2702
    %2796 = vmatprep.subr.bf16.mxu0 0
    %2797 = vmatpush1.bf16.msra.mxu0 %v2703
    %2798 = vmatprep.subr.bf16.mxu0 0
    %2799 = vmatpush1.bf16.msra.mxu0 %v2704
    %2800 = vmatprep.subr.bf16.mxu0 0
    %2801 = vmatpush1.bf16.msra.mxu0 %v2705
    %2802 = vmatprep.subr.bf16.mxu0 0
    %2803 = vmatpush1.bf16.msra.mxu0 %v2706
    %2804 = vmatprep.subr.bf16.mxu0 0
    %2805 = vmatpush1.bf16.msra.mxu0 %v2707
    %2806 = vmatprep.subr.bf16.mxu0 0
    %2807 = vmatpush1.bf16.msra.mxu0 %v2708
    %2808 = vmatprep.mubr.bf16.mxu0 %v2457
    %2809 = vmatmul.mubr.bf16.gmra.mrb[0].mxu0 %v2456
    %v2810 = vpop.f32.mrb[0].mxu0
    %v2811 = vadd.f32 %v2541, %v2810
    %v2812 = vpop.f32.mrb[0].mxu0
    %v2813 = vpop.f32.mrb[0].mxu0
    %v2814 = vpop.f32.mrb[0].mxu0
    %2815 = vdwg.mxu0
    %2816 = vmatprep.subr.bf16.mxu0 0
    %2817 = vmatpush1.bf16.msra.mxu0 %v2709
    %2818 = vmatprep.subr.bf16.mxu0 0
    %2819 = vmatpush1.bf16.msra.mxu0 %v2710
    %2820 = vmatprep.subr.bf16.mxu0 0
    %2821 = vmatpush1.bf16.msra.mxu0 %v2711
    %2822 = vmatprep.subr.bf16.mxu0 0
    %2823 = vmatpush1.bf16.msra.mxu0 %v2712
    %2824 = vmatprep.subr.bf16.mxu0 0
    %2825 = vmatpush1.bf16.msra.mxu0 %v2713
    %2826 = vmatprep.subr.bf16.mxu0 0
    %2827 = vmatpush1.bf16.msra.mxu0 %v2714
    %2828 = vmatprep.subr.bf16.mxu0 0
    %2829 = vmatpush1.bf16.msra.mxu0 %v2715
    %2830 = vmatprep.subr.bf16.mxu0 0
    %2831 = vmatpush1.bf16.msra.mxu0 %v2716
    %2832 = vmatprep.subr.bf16.mxu0 0
    %2833 = vmatpush1.bf16.msra.mxu0 %v2717
    %2834 = vmatprep.subr.bf16.mxu0 0
    %2835 = vmatpush1.bf16.msra.mxu0 %v2718
    %2836 = vmatprep.subr.bf16.mxu0 0
    %2837 = vmatpush1.bf16.msra.mxu0 %v2719
    %2838 = vmatprep.subr.bf16.mxu0 0
    %2839 = vmatpush1.bf16.msra.mxu0 %v2720
    %2840 = vmatprep.subr.bf16.mxu0 0
    %2841 = vmatpush1.bf16.msra.mxu0 %v2721
    %2842 = vmatprep.subr.bf16.mxu0 0
    %2843 = vmatpush1.bf16.msra.mxu0 %v2722
    %2844 = vmatprep.subr.bf16.mxu0 0
    %2845 = vmatpush1.bf16.msra.mxu0 %v2723
    %2846 = vmatprep.subr.bf16.mxu0 0
    %2847 = vmatpush1.bf16.msra.mxu0 %v2724
    %2848 = vmatprep.mubr.bf16.mxu0 %v2459
    %2849 = vmatmul.mubr.bf16.gmra.mrb[0].mxu0 %v2458
    %v2850 = vpop.f32.mrb[0].mxu0
    %v2851 = vadd.f32 %v2811, %v2850
    %v2852 = vpop.f32.mrb[0].mxu0
    %v2853 = vpop.f32.mrb[0].mxu0
    %v2854 = vpop.f32.mrb[0].mxu0
    %2855 = vdwg.mxu0
    %2856 = vmatprep.subr.bf16.mxu0 0
    %2857 = vmatpush1.bf16.msra.mxu0 %v2725
    %2858 = vmatprep.subr.bf16.mxu0 0
    %2859 = vmatpush1.bf16.msra.mxu0 %v2726
    %2860 = vmatprep.subr.bf16.mxu0 0
    %2861 = vmatpush1.bf16.msra.mxu0 %v2727
    %2862 = vmatprep.subr.bf16.mxu0 0
    %2863 = vmatpush1.bf16.msra.mxu0 %v2728
    %2864 = vmatprep.subr.bf16.mxu0 0
    %2865 = vmatpush1.bf16.msra.mxu0 %v2729
    %2866 = vmatprep.subr.bf16.mxu0 0
    %2867 = vmatpush1.bf16.msra.mxu0 %v2774
    %2868 = vmatprep.subr.bf16.mxu0 0
    %2869 = vmatpush1.bf16.msra.mxu0 0
    %2870 = vmatprep.subr.bf16.mxu0 0
    %2871 = vmatpush1.bf16.msra.mxu0 0
    %2872 = vmatprep.subr.bf16.mxu0 0
    %2873 = vmatpush1.bf16.msra.mxu0 0
    %2874 = vmatprep.subr.bf16.mxu0 0
    %2875 = vmatpush1.bf16.msra.mxu0 0
    %2876 = vmatprep.subr.bf16.mxu0 0
    %2877 = vmatpush1.bf16.msra.mxu0 0
    %2878 = vmatprep.subr.bf16.mxu0 0
    %2879 = vmatpush1.bf16.msra.mxu0 0
    %2880 = vmatprep.subr.bf16.mxu0 0
    %2881 = vmatpush1.bf16.msra.mxu0 0
    %2882 = vmatprep.subr.bf16.mxu0 0
    %2883 = vmatpush1.bf16.msra.mxu0 0
    %2884 = vmatprep.subr.bf16.mxu0 0
    %2885 = vmatpush1.bf16.msra.mxu0 0
    %2886 = vmatprep.subr.bf16.mxu0 0
    %2887 = vmatpush1.bf16.msra.mxu0 0
    %2888 = vmatprep.mubr.bf16.mxu0 0
    %2889 = vmatmul.mubr.bf16.gmra.mrb[0].mxu0 %v2770
    %v2890 = vpop.f32.mrb[0].mxu0
    %v2891 = vadd.f32 %v2851, %v2890
    %v2892 = vpop.f32.mrb[0].mxu0
    %v2893 = vpop.f32.mrb[0].mxu0
    %v2894 = vpop.f32.mrb[0].mxu0
    %2895 = vdwg.mxu0
    %2896 = vst [vmem:[%s7] sm:$0xff] %v2891
    // Predicated region
    $region42: #{qnetwork_forward.1} parent=1 // pred_check
      _
    $region43: #{qnetwork_forward.1} parent=1 // pred_check_branch
      %2898 = sbr.rel (0) target = $region45
    $region44: #{qnetwork_forward.1} parent=1 // pred_region
      _
    $region45: #{qnetwork_forward.1} parent=1 // pred_fallthru
      _
    // Predicated region
    $region46: #{qnetwork_forward.1} parent=1 // pred_check
      _
    $region47: #{qnetwork_forward.1} parent=1 // pred_check_branch
      %2900 = sbr.rel (0) target = $region49
    $region48: #{qnetwork_forward.1} parent=1 // pred_region
      _
    $region49: #{qnetwork_forward.1} parent=1 // pred_fallthru
      _
    %2901 = vsyncpa [#allocation3], 1
    %2902 = vsyncpa [#allocation5], 1

</llo_original>
